<compile_context>
chip_gen: v7x
topology: tpu7x:2x2x1
jax: 0.10.0
libtpu: 0.0.40
codegen_flags: <defaults>
</compile_context>

<pallas_src>
import math
import functools

import jax
import jax.numpy as jnp
from jax import lax
from jax.experimental import pallas as pl
from jax.experimental.pallas import tpu as pltpu

_NEG_INF = -1e30


# ------------------------------ budgets & tiling helpers ------------------------------

def _vmem_budget_bytes():
    """Generation-aware VMEM budget: ~96 MiB on v5e/v6e (128 MiB phys), ~48 MiB on v7x."""
    cap = 64 * 1024 * 1024
    try:
        info = pltpu.get_tpu_info()
        cap = int(getattr(info, "vmem_capacity_bytes", cap)) or cap
    except Exception:
        pass
    return min((cap * 3) // 4, 112 * 1024 * 1024)


def _cparams(dimension_semantics, vmem_limit):
    return pltpu.CompilerParams(dimension_semantics=dimension_semantics,
                                vmem_limit_bytes=vmem_limit)


def _fit_tile(dim, cap, align):
    """Largest `align`-multiple divisor of `dim` that is <= cap, else `dim` itself."""
    if dim <= cap:
        return dim
    t = (cap // align) * align
    while t >= align:
        if dim % t == 0:
            return t
        t -= align
    return dim


# ----------------------------- in-kernel math helpers -----------------------------

def _rmsnorm(x, eps=1e-6):
    # matches torch rmsnorm semantics (computed in f32)
    return x * lax.rsqrt(jnp.mean(x * x, axis=-1, keepdims=True) + eps)


def _erf_approx(x):
    # Abramowitz & Stegun 7.1.26 polynomial erf (|err| ~ 1.5e-7): exp + VPU ops only,
    # so it lowers on every TPU generation and matches torch's exact-erf GELU closely.
    a1, a2, a3, a4, a5 = 0.254829592, -0.284496736, 1.421413741, -1.453152027, 1.061405429
    p = 0.3275911
    ax = jnp.abs(x)
    t = 1.0 / (1.0 + p * ax)
    poly = ((((a5 * t + a4) * t + a3) * t + a2) * t + a1) * t
    y = 1.0 - poly * jnp.exp(-ax * ax)
    return jnp.where(x >= 0.0, y, -y)


def _gelu_erf(x):
    # exact-erf GELU (PyTorch F.gelu default)
    return 0.5 * x * (1.0 + _erf_approx(x * 0.7071067811865476))


# ------------------------- kernel 1: rmsnorm + fused QKV + RoPE -------------------------

def qkv_rope_kernel(x_ref, cos_ref, sin_ref, w_ref, q_ref, k_ref, v_ref, *, n_head, hd):
    C = n_head * hd
    # rmsnorm computed once per (b, t) tile (no per-head recomputation anymore).
    xn = _rmsnorm(x_ref[0]).astype(jnp.bfloat16)                          # (tq, C)
    # one wide MXU dot against the resident (C, 3C) weight slab
    qkv = jnp.dot(xn, w_ref[...], preferred_element_type=jnp.float32)     # (tq, 3C) f32
    cosf = cos_ref[...]                                                   # (tq, hd)
    sinf = sin_ref[...]

    def rope(m):
        # y = m*[cos,cos] + rotate_half(m)*[sin,-sin]; single per-head XLU roll
        # (shift by hd/2 on a hd-wide tile is direction-agnostic).
        return m * cosf + pltpu.roll(m, shift=hd // 2, axis=1) * sinf

    for h in range(n_head):                                               # static unroll
        sl = slice(h * hd, (h + 1) * hd)
        q_ref[0, :, sl] = rope(qkv[:, h * hd:(h + 1) * hd]).astype(q_ref.dtype)
        k_ref[0, :, sl] = rope(qkv[:, C + h * hd:C + (h + 1) * hd]).astype(k_ref.dtype)
        v_ref[0, :, sl] = qkv[:, 2 * C + h * hd:2 * C + (h + 1) * hd].astype(v_ref.dtype)


def qkv_rope_proj(x, cosf, sinf, w_qkv, *, n_head, tq, vmem_limit):
    B, T, C = x.shape
    hd = C // n_head
    out_sds = jax.ShapeDtypeStruct((B, T, C), jnp.bfloat16)
    out_spec = pl.BlockSpec((1, tq, C), lambda b, t: (b, t, 0))
    # TODO(synk): for very large C the resident (C, 3C) weight may exceed the v7x VMEM
    # budget; a streamed-weight fallback would be needed there.
    return pl.pallas_call(
        functools.partial(qkv_rope_kernel, n_head=n_head, hd=hd),
        out_shape=(out_sds, out_sds, out_sds),
        grid=(B, T // tq),
        in_specs=[
            pl.BlockSpec((1, tq, C), lambda b, t: (b, t, 0)),
            pl.BlockSpec((tq, hd), lambda b, t: (t, 0)),
            pl.BlockSpec((tq, hd), lambda b, t: (t, 0)),
            pl.BlockSpec((C, 3 * C), lambda b, t: (0, 0)),   # constant index -> resident
        ],
        out_specs=(out_spec, out_spec, out_spec),
        compiler_params=_cparams(("parallel", "parallel"), vmem_limit),
    )(x, cosf, sinf, w_qkv)


# -------------- kernel 2: flash attention (all heads) + out-proj + residual --------------

def attn_kernel(x_ref, q_ref, k_ref, v_ref, wao_ref, o_ref,
                m_scr, l_scr, acc_scr, *,
                sm_scale, attn_scale, n_head, hd, tq, tkv):
    i = pl.program_id(1)          # query tile
    j = pl.program_id(2)          # kv tile (reduction axis)
    nj = pl.num_programs(2)

    @pl.when(j == 0)
    def _():
        m_scr[...] = jnp.full(m_scr.shape, -jnp.inf, m_scr.dtype)
        l_scr[...] = jnp.zeros(l_scr.shape, l_scr.dtype)
        acc_scr[...] = jnp.zeros(acc_scr.shape, acc_scr.dtype)

    # KV tiles fully above the causal diagonal are skipped; their DMA is also skipped
    # because the K/V index_map is clamped at the diagonal (block index unchanged).
    @pl.when(j * tkv <= i * tq + (tq - 1))
    def _():
        q = q_ref[0]              # (tq, C)  bf16, all heads
        k = k_ref[0]              # (tkv, C) bf16
        v = v_ref[0]              # (tkv, C) bf16

        # Build the additive causal bias only for diagonal-straddling tiles.
        needs_mask = (j * tkv + (tkv - 1)) > (i * tq)

        def _bias():
            rows = i * tq + lax.broadcasted_iota(jnp.int32, (tq, tkv), 0)
            cols = j * tkv + lax.broadcasted_iota(jnp.int32, (tq, tkv), 1)
            return jnp.where(rows >= cols, 0.0, _NEG_INF).astype(jnp.float32)

        bias = lax.cond(needs_mask, _bias, lambda: jnp.zeros((tq, tkv), jnp.float32))

        for h in range(n_head):   # static unroll; per-head online-softmax update
            sl = slice(h * hd, (h + 1) * hd)
            # q @ k^T without an explicit transpose: contract the last dims of both.
            s = lax.dot_general(q[:, sl], k[:, sl], (((1,), (1,)), ((), ())),
                                preferred_element_type=jnp.float32) * sm_scale + bias
            m_prev = m_scr[:, h:h + 1]
            m_new = jnp.maximum(m_prev, jnp.max(s, axis=-1, keepdims=True))
            alpha = jnp.exp(m_prev - m_new)
            p = jnp.exp(s - m_new)
            l_scr[:, h:h + 1] = alpha * l_scr[:, h:h + 1] + jnp.sum(p, axis=-1, keepdims=True)
            acc_scr[:, sl] = alpha * acc_scr[:, sl] + jnp.dot(
                p.astype(jnp.bfloat16), v[:, sl], preferred_element_type=jnp.float32)
            m_scr[:, h:h + 1] = m_new

    # Epilogue: normalize each head, one wide (tq,C)@(C,C) out-projection (K = C, not hd),
    # fused scaled residual add, single lane-dense (tq, C) store.
    @pl.when(j == nj - 1)
    def _():
        inv_l = pl.reciprocal(l_scr[...], approx=True)            # (tq, n_head)
        parts = [acc_scr[:, h * hd:(h + 1) * hd] * inv_l[:, h:h + 1]
                 for h in range(n_head)]
        y = jnp.concatenate(parts, axis=1).astype(jnp.bfloat16)   # (tq, C)
        proj = jnp.dot(y, wao_ref[...], preferred_element_type=jnp.float32)
        o_ref[0] = x_ref[0] + attn_scale * proj


def attention(x, q, k, v, wao, *, sm_scale, attn_scale, n_head, tq, tkv, vmem_limit):
    B, T, C = x.shape
    hd = C // n_head
    grid = (B, T // tq, T // tkv)

    def kv_index(b, i, j):
        # clamp above-diagonal KV tiles to the last valid block -> no wasted DMA
        last_valid = (i * tq + (tq - 1)) // tkv
        return (b, jnp.minimum(j, last_valid), 0)

    kern = functools.partial(attn_kernel, sm_scale=sm_scale, attn_scale=attn_scale,
                             n_head=n_head, hd=hd, tq=tq, tkv=tkv)
    return pl.pallas_call(
        kern,
        out_shape=jax.ShapeDtypeStruct((B, T, C), x.dtype),
        grid=grid,
        in_specs=[
            pl.BlockSpec((1, tq, C), lambda b, i, j: (b, i, 0)),   # residual x
            pl.BlockSpec((1, tq, C), lambda b, i, j: (b, i, 0)),   # q (all heads)
            pl.BlockSpec((1, tkv, C), kv_index),                   # k (causally clamped)
            pl.BlockSpec((1, tkv, C), kv_index),                   # v (causally clamped)
            pl.BlockSpec((C, C), lambda b, i, j: (0, 0)),          # wao: resident
        ],
        out_specs=pl.BlockSpec((1, tq, C), lambda b, i, j: (b, i, 0)),
        scratch_shapes=[
            pltpu.VMEM((tq, n_head), jnp.float32),                 # per-head running max
            pltpu.VMEM((tq, n_head), jnp.float32),                 # per-head denominator
            pltpu.VMEM((tq, C), jnp.float32),                      # per-head PV accumulators
        ],
        compiler_params=_cparams(("parallel", "parallel", "arbitrary"), vmem_limit),
    )(x, q, k, v, wao)


# ------------------------------ kernel 3: MLP + residual ------------------------------

def mlp_kernel(x_ref, wfc_ref, wfo_ref, o_ref, xn_scr, acc_scr):
    n = pl.program_id(2)

    @pl.when(n == 0)
    def _():
        # rmsnorm hoisted out of the hidden-dim reduction axis
        xn_scr[...] = _rmsnorm(x_ref[0]).astype(jnp.bfloat16)
        acc_scr[...] = jnp.zeros(acc_scr.shape, acc_scr.dtype)

    hmid = _gelu_erf(jnp.dot(xn_scr[...], wfc_ref[...],
                             preferred_element_type=jnp.float32))          # (tq, thid) f32
    acc_scr[...] += jnp.dot(hmid.astype(jnp.bfloat16), wfo_ref[...],
                            preferred_element_type=jnp.float32)

    @pl.when(n == pl.num_programs(2) - 1)
    def _():
        o_ref[0] = x_ref[0] + acc_scr[...]


def mlp(x, wfc, wfo, *, tq, thid, vmem_limit):
    B, T, C = x.shape
    H4 = wfc.shape[1]
    grid = (B, T // tq, H4 // thid)
    # When thid == 4C (weights fit VMEM) the weight index maps are constant -> resident.
    return pl.pallas_call(
        mlp_kernel,
        out_shape=jax.ShapeDtypeStruct((B, T, C), x.dtype),
        grid=grid,
        in_specs=[
            pl.BlockSpec((1, tq, C), lambda b, t, n: (b, t, 0)),
            pl.BlockSpec((C, thid), lambda b, t, n: (0, n)),
            pl.BlockSpec((thid, C), lambda b, t, n: (n, 0)),
        ],
        out_specs=pl.BlockSpec((1, tq, C), lambda b, t, n: (b, t, 0)),
        scratch_shapes=[pltpu.VMEM((tq, C), jnp.bfloat16),     # cached rmsnorm(x)
                        pltpu.VMEM((tq, C), jnp.float32)],     # output accumulator
        compiler_params=_cparams(("parallel", "parallel", "arbitrary"), vmem_limit),
    )(x, wfc, wfo)


# -------------------------- kernel 4: final rmsnorm + lm head --------------------------

def lm_head_kernel(x_ref, w_ref, o_ref):
    xn = _rmsnorm(x_ref[...]).astype(jnp.bfloat16)                          # (B, C)
    # logits[b, v] = sum_c xn[b, c] * wte[v, c] — consumes wte directly, no wte.T copy.
    o_ref[...] = lax.dot_general(xn, w_ref[...], (((1,), (1,)), ((), ())),
                                 preferred_element_type=jnp.float32)


def lm_head(x_last, wte, *, tv, vmem_limit):
    B, C = x_last.shape
    V = wte.shape[0]
    return pl.pallas_call(
        lm_head_kernel,
        out_shape=jax.ShapeDtypeStruct((B, V), jnp.float32),
        grid=(V // tv,),
        in_specs=[
            pl.BlockSpec((B, C), lambda v: (0, 0)),
            pl.BlockSpec((tv, C), lambda v: (v, 0)),
        ],
        out_specs=pl.BlockSpec((B, tv), lambda v: (0, v)),
        compiler_params=_cparams(("parallel",), vmem_limit),
    )(x_last, wte)


# ------------------------------------ model glue ------------------------------------

def rotary_tables(T, head_dim, base=10000.0):
    inv_freq = 1.0 / base ** (jnp.arange(0, head_dim, 2, dtype=jnp.float32) / head_dim)
    t = jnp.arange(T, dtype=jnp.float32)
    freqs = jnp.outer(t, inv_freq)                    # (T, head_dim // 2)
    cos, sin = jnp.cos(freqs), jnp.sin(freqs)
    # Full-width tables with the rotate-half sign pattern baked in so the kernel uses a
    # single XLU roll per head instead of lane-axis slice+concat.
    cos_full = jnp.concatenate([cos, cos], axis=-1)   # (T, head_dim)
    sin_full = jnp.concatenate([sin, -sin], axis=-1)
    return cos_full, sin_full


def gpt_forward(idx, params, *, n_head, n_layer,
                tq_cap=256, tkv_cap=128, thid=None, tv_cap=2048):
    """Equivalent to GPT.forward(idx, targets=None, return_logits=True, all_logits=False)."""
    wte = params["wte"]                               # (V, C) bf16, tied with lm_head
    V, C = wte.shape
    B, T = idx.shape
    assert C % n_head == 0
    hd = C // n_head
    assert hd % 2 == 0

    vmem_limit = _vmem_budget_bytes()

    # TODO(synk): embedding gather kept in plain JAX (pure lookup, not the compute hot path).
    x = jnp.take(wte, idx, axis=0).astype(jnp.float32)        # (B, T, C) f32 residual stream

    # bf16 MXU operands pack (16,128) vregs -> 16-aligned seq tiles, 128-aligned lane tiles.
    tq = _fit_tile(T, tq_cap, 16)
    tkv = _fit_tile(T, tkv_cap, 16)
    tv = _fit_tile(V, tv_cap, 128)
    if thid is None:
        # MLP weights resident (single hidden step) when they fit the per-generation
        # budget; otherwise stream the 4C hidden dim as a reduction axis.
        resident_bytes = 32 * C * C                   # wfc+wfo bf16, x2 pipeline buffers
        thid = 4 * C if resident_bytes <= vmem_limit // 2 else _fit_tile(4 * C, 1024, 128)
    assert (4 * C) % thid == 0

    cosf, sinf = rotary_tables(T, hd)
    sm_scale = 1.0 / math.sqrt(hd)
    attn_scale = 1.0 / math.sqrt(2 * n_layer)

    for blk in params["blocks"]:
        q, k, v = qkv_rope_proj(x, cosf, sinf, blk["w_qkv"],
                                n_head=n_head, tq=tq, vmem_limit=vmem_limit)
        x = attention(x, q, k, v, blk["wao"], sm_scale=sm_scale, attn_scale=attn_scale,
                      n_head=n_head, tq=tq, tkv=tkv, vmem_limit=vmem_limit)
        x = mlp(x, blk["wfc"], blk["wfo"], tq=tq, thid=thid, vmem_limit=vmem_limit)

    x_last = x[:, -1, :]                              # == x[:, [-1], :] squeezed
    logits = lm_head(x_last, wte, tv=tv, vmem_limit=vmem_limit)   # (B, V) f32
    return logits[:, None, :], None                   # ((B, 1, V), loss=None)


# --------------------------- plain-JAX reference for validation ---------------------------

def _reference_forward(idx, params, *, n_head, n_layer):
    wte = params["wte"].astype(jnp.float32)
    V, C = wte.shape
    B, T = idx.shape
    hd = C // n_head
    x = jnp.take(wte, idx, axis=0)

    inv_freq = 1.0 / 10000.0 ** (jnp.arange(0, hd, 2, dtype=jnp.float32) / hd)
    freqs = jnp.outer(jnp.arange(T, dtype=jnp.float32), inv_freq)
    cos, sin = jnp.cos(freqs), jnp.sin(freqs)         # (T, hd // 2)

    def rms(u):
        return u * lax.rsqrt(jnp.mean(u * u, axis=-1, keepdims=True) + 1e-6)

    def rope(u):                                      # u: (B, H, T, hd), torch-style
        d = hd // 2
        u1, u2 = u[..., :d], u[..., d:]
        return jnp.concatenate([u1 * cos + u2 * sin, -u1 * sin + u2 * cos], axis=-1)

    attn_scale = 1.0 / math.sqrt(2 * n_layer)
    mask = jnp.tril(jnp.ones((T, T), dtype=bool))
    for blk in params["blocks"]:
        xn = rms(x)
        w_qkv = blk["w_qkv"].astype(jnp.float32)
        wq, wk, wv = w_qkv[:, :C], w_qkv[:, C:2 * C], w_qkv[:, 2 * C:]

        def split(w):
            return (xn @ w).reshape(B, T, n_head, hd).transpose(0, 2, 1, 3)

        q, k, v = split(wq), split(wk), split(wv)
        q, k = rope(q), rope(k)
        s = jnp.einsum("bhqd,bhkd->bhqk", q, k) / math.sqrt(hd)
        s = jnp.where(mask, s, _NEG_INF)
        p = jax.nn.softmax(s, axis=-1)
        y = jnp.einsum("bhqk,bhkd->bhqd", p, v).transpose(0, 2, 1, 3).reshape(B, T, C)
        x = x + attn_scale * (y @ blk["wao"].astype(jnp.float32))
        hmid = jax.nn.gelu(rms(x) @ blk["wfc"].astype(jnp.float32), approximate=False)
        x = x + hmid @ blk["wfo"].astype(jnp.float32)

    logits = rms(x)[:, -1, :] @ wte.T
    return logits[:, None, :]


# ------------------------------------------ main ------------------------------------------

if __name__ == "__main__":
    # small but lane-aligned GPT config (head_dim = 128)
    B, T = 2, 16
    n_layer, n_head, n_embd, vocab_size = 2, 2, 256, 1024

    key = jax.random.PRNGKey(0)
    keys = jax.random.split(key, 2 + 4 * n_layer)
    scale = 0.08

    def w(k, shape):
        return (scale * jax.random.normal(k, shape, jnp.float32)).astype(jnp.bfloat16)

    wte = w(keys[0], (vocab_size, n_embd))
    blocks = []
    ki = 1
    for _ in range(n_layer):
        blocks.append(dict(
            w_qkv=w(keys[ki + 0], (n_embd, 3 * n_embd)),       # [Q | K | V] columns
            wao=w(keys[ki + 1], (n_embd, n_embd)),
            wfc=w(keys[ki + 2], (n_embd, 4 * n_embd)),
            wfo=w(keys[ki + 3], (4 * n_embd, n_embd)),
        ))
        ki += 4
    params = dict(wte=wte, blocks=blocks)

    idx = jax.random.randint(keys[ki], (B, T), 0, vocab_size, dtype=jnp.int32)

    ref = jax.block_until_ready(
        _reference_forward(idx, params, n_head=n_head, n_layer=n_layer))
    tol = 0.1 * float(jnp.max(jnp.abs(ref))) + 1e-3   # loose: bf16 MXU + approx reciprocal

    # (1) default path: resident MLP weights (single hidden step)
    logits, loss = gpt_forward(idx, params, n_head=n_head, n_layer=n_layer)
    logits = jax.block_until_ready(logits)
    assert logits.shape == (B, 1, vocab_size) and logits.dtype == jnp.float32
    assert loss is None
    err = float(jnp.max(jnp.abs(logits - ref)))
    assert err < tol, f"resident-MLP path: max abs error {err} exceeds tolerance {tol}"

    # (2) streamed-hidden fallback path (thid < 4C) to exercise the reduction grid axis
    logits2, _ = gpt_forward(idx, params, n_head=n_head, n_layer=n_layer, thid=2 * n_embd)
    logits2 = jax.block_until_ready(logits2)
    err2 = float(jnp.max(jnp.abs(logits2 - ref)))
    assert err2 < tol, f"streamed-MLP path: max abs error {err2} exceeds tolerance {tol}"

    print("KERNEL_OK")
</pallas_src>

<mosaic_0001>
module attributes {stable_mosaic.version = 11 : i64} {
  func.func @qkv_rope_kernel(%arg0: i32, %arg1: i32, %arg2: memref<1x16x256xf32, #tpu.memory_space<vmem>>, %arg3: memref<16x128xf32, #tpu.memory_space<vmem>>, %arg4: memref<16x128xf32, #tpu.memory_space<vmem>>, %arg5: memref<256x768xbf16, #tpu.memory_space<vmem>>, %arg6: memref<1x16x256xbf16, #tpu.memory_space<vmem>>, %arg7: memref<1x16x256xbf16, #tpu.memory_space<vmem>>, %arg8: memref<1x16x256xbf16, #tpu.memory_space<vmem>>) attributes {dimension_semantics = [#tpu.dimension_semantics<parallel>, #tpu.dimension_semantics<parallel>], iteration_bounds = array<i64: 2, 1>, scalar_prefetch = 0 : i64, scratch_operands = 0 : i64, tpu.core_type = #tpu.core_type<tc>, window_params = [{transform_indices = @transform_0, window_bounds = array<i64: 1, 16, 256>}, {transform_indices = @transform_1, window_bounds = array<i64: 16, 128>}, {transform_indices = @transform_2, window_bounds = array<i64: 16, 128>}, {pipeline_mode = #tpu.pipeline_mode<synchronous>, transform_indices = @transform_3, window_bounds = array<i64: 256, 768>}, {transform_indices = @transform_4, window_bounds = array<i64: 1, 16, 256>}, {transform_indices = @transform_5, window_bounds = array<i64: 1, 16, 256>}, {transform_indices = @transform_6, window_bounds = array<i64: 1, 16, 256>}]} {
    %c0 = arith.constant 0 : index
    %c0_0 = arith.constant 0 : index
    %c0_1 = arith.constant 0 : index
    %0 = vector.load %arg2[%c0, %c0_0, %c0_1] : memref<1x16x256xf32, #tpu.memory_space<vmem>>, vector<1x16x256xf32>
    %1 = vector.shape_cast %0 : vector<1x16x256xf32> to vector<16x256xf32>
    %2 = arith.mulf %1, %1 : vector<16x256xf32>
    %cst = arith.constant dense<0.000000e+00> : vector<16xf32>
    %3 = vector.multi_reduction <add>, %2, %cst [1] : vector<16x256xf32> to vector<16xf32>
    %4 = vector.shape_cast %3 : vector<16xf32> to vector<16x1xf32>
    %cst_2 = arith.constant 2.560000e+02 : f32
    %5 = vector.broadcast %cst_2 : f32 to vector<16x1xf32>
    %6 = arith.divf %4, %5 : vector<16x1xf32>
    %cst_3 = arith.constant 9.99999997E-7 : f32
    %7 = vector.broadcast %cst_3 : f32 to vector<16x1xf32>
    %8 = arith.addf %6, %7 : vector<16x1xf32>
    %9 = math.rsqrt %8 : vector<16x1xf32>
    %10 = vector.broadcast %9 : vector<16x1xf32> to vector<16x256xf32>
    %11 = arith.mulf %1, %10 : vector<16x256xf32>
    %12 = arith.truncf %11 : vector<16x256xf32> to vector<16x256xbf16>
    %c0_4 = arith.constant 0 : index
    %c0_5 = arith.constant 0 : index
    %13 = vector.load %arg5[%c0_4, %c0_5] : memref<256x768xbf16, #tpu.memory_space<vmem>>, vector<256x768xbf16>
    %cst_6 = arith.constant dense<0.000000e+00> : vector<16x768xf32>
    %14 = tpu.matmul %12, %13, %cst_6 {dimension_numbers = #tpu.dot_dimension_numbers<[1], [0], [0], [1], [0, 0, 1, 1], [], []>} : vector<16x256xbf16>, vector<256x768xbf16>, vector<16x768xf32> -> vector<16x768xf32>
    %c0_7 = arith.constant 0 : index
    %c0_8 = arith.constant 0 : index
    %15 = vector.load %arg3[%c0_7, %c0_8] : memref<16x128xf32, #tpu.memory_space<vmem>>, vector<16x128xf32>
    %c0_9 = arith.constant 0 : index
    %c0_10 = arith.constant 0 : index
    %16 = vector.load %arg4[%c0_9, %c0_10] : memref<16x128xf32, #tpu.memory_space<vmem>>, vector<16x128xf32>
    %17 = vector.extract_strided_slice %14 {offsets = [0, 0], sizes = [16, 128], strides = [1, 1]} : vector<16x768xf32> to vector<16x128xf32>
    %18 = arith.mulf %17, %15 : vector<16x128xf32>
    %c64_i32 = arith.constant 64 : i32
    %19 = tpu.dynamic_rotate %17 by %c64_i32 dim 1 : vector<16x128xf32>, i32 -> vector<16x128xf32>
    %20 = arith.mulf %19, %16 : vector<16x128xf32>
    %21 = arith.addf %18, %20 : vector<16x128xf32>
    %22 = arith.truncf %21 : vector<16x128xf32> to vector<16x128xbf16>
    %c0_11 = arith.constant 0 : index
    %c0_12 = arith.constant 0 : index
    %c0_13 = arith.constant 0 : index
    %23 = vector.load %arg6[%c0_11, %c0_12, %c0_13] : memref<1x16x256xbf16, #tpu.memory_space<vmem>>, vector<1x16x128xbf16>
    %24 = vector.shape_cast %23 : vector<1x16x128xbf16> to vector<16x128xbf16>
    %25 = vector.shape_cast %22 : vector<16x128xbf16> to vector<1x16x128xbf16>
    tpu.vector_store %arg6[%c0_11, %c0_12, %c0_13], %25 {strides = array<i32>} : memref<1x16x256xbf16, #tpu.memory_space<vmem>>, vector<1x16x128xbf16>,
    %26 = vector.extract_strided_slice %14 {offsets = [0, 256], sizes = [16, 128], strides = [1, 1]} : vector<16x768xf32> to vector<16x128xf32>
    %27 = arith.mulf %26, %15 : vector<16x128xf32>
    %c64_i32_14 = arith.constant 64 : i32
    %28 = tpu.dynamic_rotate %26 by %c64_i32_14 dim 1 : vector<16x128xf32>, i32 -> vector<16x128xf32>
    %29 = arith.mulf %28, %16 : vector<16x128xf32>
    %30 = arith.addf %27, %29 : vector<16x128xf32>
    %31 = arith.truncf %30 : vector<16x128xf32> to vector<16x128xbf16>
    %c0_15 = arith.constant 0 : index
    %c0_16 = arith.constant 0 : index
    %c0_17 = arith.constant 0 : index
    %32 = vector.load %arg7[%c0_15, %c0_16, %c0_17] : memref<1x16x256xbf16, #tpu.memory_space<vmem>>, vector<1x16x128xbf16>
    %33 = vector.shape_cast %32 : vector<1x16x128xbf16> to vector<16x128xbf16>
    %34 = vector.shape_cast %31 : vector<16x128xbf16> to vector<1x16x128xbf16>
    tpu.vector_store %arg7[%c0_15, %c0_16, %c0_17], %34 {strides = array<i32>} : memref<1x16x256xbf16, #tpu.memory_space<vmem>>, vector<1x16x128xbf16>,
    %35 = vector.extract_strided_slice %14 {offsets = [0, 512], sizes = [16, 128], strides = [1, 1]} : vector<16x768xf32> to vector<16x128xf32>
    %36 = arith.truncf %35 : vector<16x128xf32> to vector<16x128xbf16>
    %c0_18 = arith.constant 0 : index
    %c0_19 = arith.constant 0 : index
    %c0_20 = arith.constant 0 : index
    %37 = vector.load %arg8[%c0_18, %c0_19, %c0_20] : memref<1x16x256xbf16, #tpu.memory_space<vmem>>, vector<1x16x128xbf16>
    %38 = vector.shape_cast %37 : vector<1x16x128xbf16> to vector<16x128xbf16>
    %39 = vector.shape_cast %36 : vector<16x128xbf16> to vector<1x16x128xbf16>
    tpu.vector_store %arg8[%c0_18, %c0_19, %c0_20], %39 {strides = array<i32>} : memref<1x16x256xbf16, #tpu.memory_space<vmem>>, vector<1x16x128xbf16>,
    %40 = vector.extract_strided_slice %14 {offsets = [0, 128], sizes = [16, 128], strides = [1, 1]} : vector<16x768xf32> to vector<16x128xf32>
    %41 = arith.mulf %40, %15 : vector<16x128xf32>
    %c64_i32_21 = arith.constant 64 : i32
    %42 = tpu.dynamic_rotate %40 by %c64_i32_21 dim 1 : vector<16x128xf32>, i32 -> vector<16x128xf32>
    %43 = arith.mulf %42, %16 : vector<16x128xf32>
    %44 = arith.addf %41, %43 : vector<16x128xf32>
    %45 = arith.truncf %44 : vector<16x128xf32> to vector<16x128xbf16>
    %c0_22 = arith.constant 0 : index
    %c0_23 = arith.constant 0 : index
    %c128 = arith.constant 128 : index
    %46 = vector.load %arg6[%c0_22, %c0_23, %c128] : memref<1x16x256xbf16, #tpu.memory_space<vmem>>, vector<1x16x128xbf16>
    %47 = vector.shape_cast %46 : vector<1x16x128xbf16> to vector<16x128xbf16>
    %48 = vector.shape_cast %45 : vector<16x128xbf16> to vector<1x16x128xbf16>
    tpu.vector_store %arg6[%c0_22, %c0_23, %c128], %48 {strides = array<i32>} : memref<1x16x256xbf16, #tpu.memory_space<vmem>>, vector<1x16x128xbf16>,
    %49 = vector.extract_strided_slice %14 {offsets = [0, 384], sizes = [16, 128], strides = [1, 1]} : vector<16x768xf32> to vector<16x128xf32>
    %50 = arith.mulf %49, %15 : vector<16x128xf32>
    %c64_i32_24 = arith.constant 64 : i32
    %51 = tpu.dynamic_rotate %49 by %c64_i32_24 dim 1 : vector<16x128xf32>, i32 -> vector<16x128xf32>
    %52 = arith.mulf %51, %16 : vector<16x128xf32>
    %53 = arith.addf %50, %52 : vector<16x128xf32>
    %54 = arith.truncf %53 : vector<16x128xf32> to vector<16x128xbf16>
    %c0_25 = arith.constant 0 : index
    %c0_26 = arith.constant 0 : index
    %c128_27 = arith.constant 128 : index
    %55 = vector.load %arg7[%c0_25, %c0_26, %c128_27] : memref<1x16x256xbf16, #tpu.memory_space<vmem>>, vector<1x16x128xbf16>
    %56 = vector.shape_cast %55 : vector<1x16x128xbf16> to vector<16x128xbf16>
    %57 = vector.shape_cast %54 : vector<16x128xbf16> to vector<1x16x128xbf16>
    tpu.vector_store %arg7[%c0_25, %c0_26, %c128_27], %57 {strides = array<i32>} : memref<1x16x256xbf16, #tpu.memory_space<vmem>>, vector<1x16x128xbf16>,
    %58 = vector.extract_strided_slice %14 {offsets = [0, 640], sizes = [16, 128], strides = [1, 1]} : vector<16x768xf32> to vector<16x128xf32>
    %59 = arith.truncf %58 : vector<16x128xf32> to vector<16x128xbf16>
    %c0_28 = arith.constant 0 : index
    %c0_29 = arith.constant 0 : index
    %c128_30 = arith.constant 128 : index
    %60 = vector.load %arg8[%c0_28, %c0_29, %c128_30] : memref<1x16x256xbf16, #tpu.memory_space<vmem>>, vector<1x16x128xbf16>
    %61 = vector.shape_cast %60 : vector<1x16x128xbf16> to vector<16x128xbf16>
    %62 = vector.shape_cast %59 : vector<16x128xbf16> to vector<1x16x128xbf16>
    tpu.vector_store %arg8[%c0_28, %c0_29, %c128_30], %62 {strides = array<i32>} : memref<1x16x256xbf16, #tpu.memory_space<vmem>>, vector<1x16x128xbf16>,
    return
  }
  func.func @transform_0(%arg0: i32, %arg1: i32) -> (i32, i32, i32) {
    %c0_i32 = arith.constant 0 : i32
    %c0_i32_0 = arith.constant 0 : i32
    return %arg0, %arg1, %c0_i32 : i32, i32, i32
  }
  func.func @transform_1(%arg0: i32, %arg1: i32) -> (i32, i32) {
    %c0_i32 = arith.constant 0 : i32
    %c0_i32_0 = arith.constant 0 : i32
    return %arg1, %c0_i32 : i32, i32
  }
  func.func @transform_2(%arg0: i32, %arg1: i32) -> (i32, i32) {
    %c0_i32 = arith.constant 0 : i32
    %c0_i32_0 = arith.constant 0 : i32
    return %arg1, %c0_i32 : i32, i32
  }
  func.func @transform_3(%arg0: i32, %arg1: i32) -> (i32, i32) {
    %c0_i32 = arith.constant 0 : i32
    %c0_i32_0 = arith.constant 0 : i32
    %c0_i32_1 = arith.constant 0 : i32
    return %c0_i32, %c0_i32_0 : i32, i32
  }
  func.func @transform_4(%arg0: i32, %arg1: i32) -> (i32, i32, i32) {
    %c0_i32 = arith.constant 0 : i32
    %c0_i32_0 = arith.constant 0 : i32
    return %arg0, %arg1, %c0_i32 : i32, i32, i32
  }
  func.func @transform_5(%arg0: i32, %arg1: i32) -> (i32, i32, i32) {
    %c0_i32 = arith.constant 0 : i32
    %c0_i32_0 = arith.constant 0 : i32
    return %arg0, %arg1, %c0_i32 : i32, i32, i32
  }
  func.func @transform_6(%arg0: i32, %arg1: i32) -> (i32, i32, i32) {
    %c0_i32 = arith.constant 0 : i32
    %c0_i32_0 = arith.constant 0 : i32
    return %arg0, %arg1, %c0_i32 : i32, i32, i32
  }
}

</mosaic_0001>

<llo_original>
// kernel: tpu_custom_call.1
$region0: #{tpu_custom_call.1}
  #allocation0 [shape = 'u32[]', space=smem, size = 0x4, offset = 0x4, fixed_abs, tag = 'smem constant byte address 0x4 - core index']
  #allocation1 [shape = 'u32[144,128]{1,0:T(1,128)}', space=vmem, size = 0x12000, scoped, tag = 'internal scratch']
  %s0 = inlined_call_operand.hbm [shape: f32[2,16,256], index: 0, kind: input, shape index: {}]
  %s1 = inlined_call_operand.hbm [shape: f32[16,128], index: 1, kind: input, shape index: {}]
  %s2 = inlined_call_operand.hbm [shape: f32[16,128], index: 2, kind: input, shape index: {}]
  %s3 = inlined_call_operand.hbm [shape: bf16[256,768], index: 3, kind: input, shape index: {}]
  %s4 = inlined_call_operand.hbm [shape: bf16[2,16,256], index: 4, kind: output, shape index: {0}]
  %s5 = inlined_call_operand.hbm [shape: bf16[2,16,256], index: 5, kind: output, shape index: {1}]
  %s6 = inlined_call_operand.hbm [shape: bf16[2,16,256], index: 6, kind: output, shape index: {2}]
  %7 = xla_tuple %s4, %s5, %s6
  %s8 = sld [smem:[#allocation0]]
  $region81: #{tpu_custom_call.1} parent=0
    _
  %s10 = ssub.s32 1, %s8
  %s11 = scalar_select 0, %s10, %s8
  $region1: #{tpu_custom_call.1} parent=0
    #allocation2 [shape = 'u8[32768]{0}', space=vmem, size = 0x8000, scoped, tag = 'input window, operand 0']
    #allocation3 [shape = 's32[2]{0}', space=sflag, size = 0x8, scoped, tag = 'scoped memory for tpu_custom_call.1']
    #allocation4 [shape = 's32[2]{0}', space=sflag, size = 0x8, scoped, tag = 'scoped memory for tpu_custom_call.1']
    #allocation5 [shape = 'u8[8192]{0}', space=vmem, size = 0x2000, scoped, tag = 'input window, operand 1, single buffered']
    #allocation6 [shape = 's32[1]{0}', space=sflag, size = 0x4, scoped, tag = 'scoped memory for tpu_custom_call.1']
    #allocation7 [shape = 'u8[8192]{0}', space=vmem, size = 0x2000, scoped, tag = 'input window, operand 2, single buffered']
    #allocation8 [shape = 'u8[393216]{0}', space=vmem, size = 0x60000, scoped, tag = 'input window, operand 3, single buffered']
    #allocation9 [shape = 's32[1]{0}', space=sflag, size = 0x4, scoped, tag = 'scoped memory for tpu_custom_call.1']
    #allocation10 [shape = 'u8[16384]{0}', space=vmem, size = 0x4000, scoped, tag = 'output window, operand 0']
    #allocation11 [shape = 'u8[16384]{0}', space=vmem, size = 0x4000, scoped, tag = 'output window, operand 1']
    #allocation12 [shape = 's32[2]{0}', space=sflag, size = 0x8, scoped, tag = 'scoped memory for tpu_custom_call.1']
    #allocation13 [shape = 'u8[16384]{0}', space=vmem, size = 0x4000, scoped, tag = 'output window, operand 2']
    %12 = vsyncpa [#allocation3], 0
    %s13 = scalar_lea.sflag [#allocation3], 1
    %14 = vsyncpa %s13, 0
    %15 = vsyncpa [#allocation6], 0
    %16 = vsyncpa [#allocation9], 0
    %17 = vsyncpa [#allocation4], 0
    %s18 = scalar_lea.sflag [#allocation4], 1
    %19 = vsyncpa %s18, 0
    %20 = vsyncpa [#allocation12], 0
    %s21 = scalar_lea.sflag [#allocation12], 1
    %22 = vsyncpa %s21, 0
    loop: start=0, step=1, limit=4
    $region2: #{tpu_custom_call.1} parent=1 // loop_pre_header
      _
    $region3: #{tpu_custom_call.1} parent=1 // loop_header
      %s24 = sphi 0, %s28
      %p25 = scmp.ge.s32.totalorder %s24, 4
      %s31 = sphi 0, %s43
      %s32 = sphi 0, %s39
      %s33 = sphi 0, %s31
      %s34 = sphi 0, %s32
      %s35 = sphi 0, %s33
      %s36 = sphi 0, %s34
      %s48 = sphi 0, %s50
      %s51 = sphi 0, %s48
      %s52 = sphi 0, %s51
      %s68 = sphi 0, %s52
      %s74 = sphi 0, %s76
      %s77 = sphi 0, %s74
      %s78 = sphi 0, %s77
      %s94 = sphi 0, %s78
      %s100 = sphi 0, %s102
      %s103 = sphi 0, %s100
      %s104 = sphi 0, %s103
      %s120 = sphi 0, %s104
      %s124 = sphi 0, %s124
      %s126 = sphi 0, %s124
      %s127 = sphi 0, %s126
      %s141 = sphi 0, %s127
      %s149 = sphi 0, %s151
      %s152 = sphi 0, %s149
      %s153 = sphi 0, %s152
      %s169 = sphi 0, %s153
      %s177 = sphi 0, %s179
      %s180 = sphi 0, %s177
      %s181 = sphi 0, %s180
      %s197 = sphi 0, %s181
      %s205 = sphi 0, %s207
      %s208 = sphi 0, %s205
      %s209 = sphi 0, %s208
      %s225 = sphi 0, %s209
    $region4: #{tpu_custom_call.1} parent=1 // loop_header_branch
      %27 = sbr.rel (%p25) target = $region8
    $region5: #{tpu_custom_call.1} parent=1 // loop_body
      %s29 = ssub.s32 %s24, 1
      %s30 = ssub.s32 %s24, 2
      %s37 = sadd.s32 1, %s32
      %p38 = scmp.ge.s32.totalorder %s37, 1
      %s39 = scalar_select %p38, 0, %s37
      %s40 = sadd.s32 1, %s31
      %s41 = scalar_select %p38, %s40, %s31
      %p42 = scmp.ge.s32.totalorder %s41, 2
      %s43 = scalar_select %p42, 0, %s41
      %s44 = ssub.s32 %s31, %s43
      %s45 = ssub.s32 %s32, %s39
      %s46 = sor.u32 %s44, %s45
      %p47 = scmp.eq.s32.totalorder %s46, 0
      %s49 = sadd.s32 %s48, 1
      %s50 = scalar_select %p47, %s48, %s49
      %p53 = pneg %p47
      %p54 = scmp.eq.s32.totalorder %s24, 1
      %p55 = por %p53, %p54
      %p56 = scmp.ne.s32.totalorder %s48, %s51
      %p57 = scmp.eq.s32.totalorder %s24, 0
      %p58 = por %p56, %p57
      %p59 = scmp.ne.s32.totalorder %s48, %s51
      %p60 = scmp.eq.s32.totalorder %s29, 1
      %p61 = por %p59, %p60
      %p62 = scmp.ne.s32.totalorder %s51, %s52
      %p63 = scmp.eq.s32.totalorder %s29, 0
      %p64 = por %p62, %p63
      %p65 = scmp.ne.s32.totalorder %s51, %s52
      %p66 = scmp.eq.s32.totalorder %s30, 1
      %p67 = por %p65, %p66
      %p69 = scmp.ne.s32.totalorder %s52, %s68
      %p70 = scmp.eq.s32.totalorder %s30, 0
      %p71 = por %p69, %p70
      %s72 = ssub.s32 %s32, %s39
      %p73 = scmp.eq.s32.totalorder %s72, 0
      %s75 = sadd.s32 %s74, 1
      %s76 = scalar_select %p73, %s74, %s75
      %p79 = pneg %p73
      %p80 = scmp.eq.s32.totalorder %s24, 1
      %p81 = por %p79, %p80
      %p82 = scmp.ne.s32.totalorder %s74, %s77
      %p83 = scmp.eq.s32.totalorder %s24, 0
      %p84 = por %p82, %p83
      %p85 = scmp.ne.s32.totalorder %s74, %s77
      %p86 = scmp.eq.s32.totalorder %s29, 1
      %p87 = por %p85, %p86
      %p88 = scmp.ne.s32.totalorder %s77, %s78
      %p89 = scmp.eq.s32.totalorder %s29, 0
      %p90 = por %p88, %p89
      %p91 = scmp.ne.s32.totalorder %s77, %s78
      %p92 = scmp.eq.s32.totalorder %s30, 1
      %p93 = por %p91, %p92
      %p95 = scmp.ne.s32.totalorder %s78, %s94
      %p96 = scmp.eq.s32.totalorder %s30, 0
      %p97 = por %p95, %p96
      %s98 = ssub.s32 %s32, %s39
      %p99 = scmp.eq.s32.totalorder %s98, 0
      %s101 = sadd.s32 %s100, 1
      %s102 = scalar_select %p99, %s100, %s101
      %p105 = pneg %p99
      %p106 = scmp.eq.s32.totalorder %s24, 1
      %p107 = por %p105, %p106
      %p108 = scmp.ne.s32.totalorder %s100, %s103
      %p109 = scmp.eq.s32.totalorder %s24, 0
      %p110 = por %p108, %p109
      %p111 = scmp.ne.s32.totalorder %s100, %s103
      %p112 = scmp.eq.s32.totalorder %s29, 1
      %p113 = por %p111, %p112
      %p114 = scmp.ne.s32.totalorder %s103, %s104
      %p115 = scmp.eq.s32.totalorder %s29, 0
      %p116 = por %p114, %p115
      %p117 = scmp.ne.s32.totalorder %s103, %s104
      %p118 = scmp.eq.s32.totalorder %s30, 1
      %p119 = por %p117, %p118
      %p121 = scmp.ne.s32.totalorder %s104, %s120
      %p122 = scmp.eq.s32.totalorder %s30, 0
      %p123 = por %p121, %p122
      %s125 = sadd.s32 %s124, 1
      %p128 = scmp.eq.s32.totalorder %s24, 1
      %p129 = scmp.ne.s32.totalorder %s124, %s126
      %p130 = scmp.eq.s32.totalorder %s24, 0
      %p131 = por %p129, %p130
      %p132 = scmp.ne.s32.totalorder %s124, %s126
      %p133 = scmp.eq.s32.totalorder %s29, 1
      %p134 = por %p132, %p133
      %p135 = scmp.ne.s32.totalorder %s126, %s127
      %p136 = scmp.eq.s32.totalorder %s29, 0
      %p137 = por %p135, %p136
      %p138 = scmp.ne.s32.totalorder %s126, %s127
      %p139 = scmp.eq.s32.totalorder %s30, 1
      %p140 = por %p138, %p139
      %p142 = scmp.ne.s32.totalorder %s127, %s141
      %p143 = scmp.eq.s32.totalorder %s30, 0
      %p144 = por %p142, %p143
      %s145 = ssub.s32 %s31, %s43
      %s146 = ssub.s32 %s32, %s39
      %s147 = sor.u32 %s145, %s146
      %p148 = scmp.eq.s32.totalorder %s147, 0
      %s150 = sadd.s32 %s149, 1
      %s151 = scalar_select %p148, %s149, %s150
      %p154 = pneg %p148
      %p155 = scmp.eq.s32.totalorder %s24, 1
      %p156 = por %p154, %p155
      %p157 = scmp.ne.s32.totalorder %s149, %s152
      %p158 = scmp.eq.s32.totalorder %s24, 0
      %p159 = por %p157, %p158
      %p160 = scmp.ne.s32.totalorder %s149, %s152
      %p161 = scmp.eq.s32.totalorder %s29, 1
      %p162 = por %p160, %p161
      %p163 = scmp.ne.s32.totalorder %s152, %s153
      %p164 = scmp.eq.s32.totalorder %s29, 0
      %p165 = por %p163, %p164
      %p166 = scmp.ne.s32.totalorder %s152, %s153
      %p167 = scmp.eq.s32.totalorder %s30, 1
      %p168 = por %p166, %p167
      %p170 = scmp.ne.s32.totalorder %s153, %s169
      %p171 = scmp.eq.s32.totalorder %s30, 0
      %p172 = por %p170, %p171
      %s173 = ssub.s32 %s31, %s43
      %s174 = ssub.s32 %s32, %s39
      %s175 = sor.u32 %s173, %s174
      %p176 = scmp.eq.s32.totalorder %s175, 0
      %s178 = sadd.s32 %s177, 1
      %s179 = scalar_select %p176, %s177, %s178
      %p182 = pneg %p176
      %p183 = scmp.eq.s32.totalorder %s24, 1
      %p184 = por %p182, %p183
      %p185 = scmp.ne.s32.totalorder %s177, %s180
      %p186 = scmp.eq.s32.totalorder %s24, 0
      %p187 = por %p185, %p186
      %p188 = scmp.ne.s32.totalorder %s177, %s180
      %p189 = scmp.eq.s32.totalorder %s29, 1
      %p190 = por %p188, %p189
      %p191 = scmp.ne.s32.totalorder %s180, %s181
      %p192 = scmp.eq.s32.totalorder %s29, 0
      %p193 = por %p191, %p192
      %p194 = scmp.ne.s32.totalorder %s180, %s181
      %p195 = scmp.eq.s32.totalorder %s30, 1
      %p196 = por %p194, %p195
      %p198 = scmp.ne.s32.totalorder %s181, %s197
      %p199 = scmp.eq.s32.totalorder %s30, 0
      %p200 = por %p198, %p199
      %s201 = ssub.s32 %s31, %s43
      %s202 = ssub.s32 %s32, %s39
      %s203 = sor.u32 %s201, %s202
      %p204 = scmp.eq.s32.totalorder %s203, 0
      %s206 = sadd.s32 %s205, 1
      %s207 = scalar_select %p204, %s205, %s206
      %p210 = pneg %p204
      %p211 = scmp.eq.s32.totalorder %s24, 1
      %p212 = por %p210, %p211
      %p213 = scmp.ne.s32.totalorder %s205, %s208
      %p214 = scmp.eq.s32.totalorder %s24, 0
      %p215 = por %p213, %p214
      %p216 = scmp.ne.s32.totalorder %s205, %s208
      %p217 = scmp.eq.s32.totalorder %s29, 1
      %p218 = por %p216, %p217
      %p219 = scmp.ne.s32.totalorder %s208, %s209
      %p220 = scmp.eq.s32.totalorder %s29, 0
      %p221 = por %p219, %p220
      %p222 = scmp.ne.s32.totalorder %s208, %s209
      %p223 = scmp.eq.s32.totalorder %s30, 1
      %p224 = por %p222, %p223
      %p226 = scmp.ne.s32.totalorder %s209, %s225
      %p227 = scmp.eq.s32.totalorder %s30, 0
      %p228 = por %p226, %p227
      %p229 = scmp.le.s32.totalorder 1, %s24
      %p230 = scmp.lt.s32.totalorder %s24, 3
      %p231 = pnand %p229, %p230
      %p232 = pneg %p231
      // Predicated region
      $region9: #{tpu_custom_call.1} parent=5 // pred_check
        _
      $region10: #{tpu_custom_call.1} parent=5 // pred_check_branch
        %234 = sbr.rel (%p231) target = $region12
      $region11: #{tpu_custom_call.1} parent=5 // pred_region
        %s235 = ssub.s32 %s24, 1
        // Predicated region
        $region13: #{tpu_custom_call.1} parent=11 // pred_check
          %p236 = pneg %p90
        $region14: #{tpu_custom_call.1} parent=11 // pred_check_branch
          %238 = sbr.rel (%p236) target = $region16
        $region15: #{tpu_custom_call.1} parent=11 // pred_region
          %s239 = smul.u32 2, %s34
          %s241 = ssub.s32 256, 256
          %242 = vsyncadd [#allocation6], %s241
          %s243 = smul.addr %s239, 128
          %s244 = scalar_lea.hbm %s1, %s243
          %s245 = sshll.u32 [#allocation5], 4
          %s246 = int_to_ptr.vmem [resolvable:$true] %s245
          %251 = dma.hbm_to_vmem [thread:$0]  %s244, 256, %s246, [#allocation6], 128, 128, 8
        $region16: #{tpu_custom_call.1} parent=11 // pred_fallthru
          _
        // Predicated region
        $region17: #{tpu_custom_call.1} parent=11 // pred_check
          %p252 = pneg %p116
        $region18: #{tpu_custom_call.1} parent=11 // pred_check_branch
          %254 = sbr.rel (%p252) target = $region20
        $region19: #{tpu_custom_call.1} parent=11 // pred_region
          %s255 = smul.u32 2, %s34
          %s257 = ssub.s32 256, 256
          %258 = vsyncadd [#allocation6], %s257
          %s259 = smul.addr %s255, 128
          %s260 = scalar_lea.hbm %s2, %s259
          %s261 = sshll.u32 [#allocation7], 4
          %s262 = int_to_ptr.vmem [resolvable:$true] %s261
          %267 = dma.hbm_to_vmem [thread:$0]  %s260, 256, %s262, [#allocation6], 128, 128, 8
        $region20: #{tpu_custom_call.1} parent=11 // pred_fallthru
          _
        // Predicated region
        $region21: #{tpu_custom_call.1} parent=11 // pred_check
          %p268 = pneg %p137
        $region22: #{tpu_custom_call.1} parent=11 // pred_check_branch
          %270 = sbr.rel (%p268) target = $region24
        $region23: #{tpu_custom_call.1} parent=11 // pred_region
          %s272 = ssub.s32 12288, 12288
          %273 = vsyncadd [#allocation9], %s272
          %s274 = sshll.u32 [#allocation8], 4
          %s275 = int_to_ptr.vmem [resolvable:$true] %s274
          %280 = dma.hbm_to_vmem [thread:$0]  %s3, 12288, %s275, [#allocation9], 384, 384, 24
        $region24: #{tpu_custom_call.1} parent=11 // pred_fallthru
          _
      $region12: #{tpu_custom_call.1} parent=5 // pred_fallthru
        _
      %p281 = scmp.lt.s32.totalorder %s24, 2
      // Predicated region
      $region25: #{tpu_custom_call.1} parent=5 // pred_check
        %p282 = pneg %p281
      $region26: #{tpu_custom_call.1} parent=5 // pred_check_branch
        %284 = sbr.rel (%p282) target = $region28
      $region27: #{tpu_custom_call.1} parent=5 // pred_region
        // Predicated region
        $region29: #{tpu_custom_call.1} parent=27 // pred_check
          %p285 = pneg %p58
        $region30: #{tpu_custom_call.1} parent=27 // pred_check_branch
          %287 = sbr.rel (%p285) target = $region32
        $region31: #{tpu_custom_call.1} parent=27 // pred_region
          %s288 = sand.u32 %s48, 1
          %s289 = scalar_lea.sflag [#allocation3], %s288
          %s290 = sand.u32 %s48, 1
          %s291 = smul.addr %s290, 32
          %s292 = scalar_lea.vmem [#allocation2], %s291
          %s293 = smul.u32 2, %s32
          %s295 = ssub.s32 512, 512
          %296 = vsyncadd %s289, %s295
          %s297 = smul.addr %s293, 2
          %s298 = smul.addr %s31, 4
          %s299 = sadd.s32 %s297, %s298
          %s300 = smul.addr %s299, 128
          %s301 = scalar_lea.hbm %s0, %s300
          %s302 = sshll.u32 %s292, 4
          %s303 = int_to_ptr.vmem [resolvable:$true] %s302
          %308 = dma.hbm_to_vmem [thread:$0]  %s301, 512, %s303, %s289, 256, 256, 16
        $region32: #{tpu_custom_call.1} parent=27 // pred_fallthru
          _
      $region28: #{tpu_custom_call.1} parent=5 // pred_fallthru
        _
      %p309 = scmp.le.s32.totalorder 1, %s24
      %p310 = scmp.lt.s32.totalorder %s24, 3
      %p311 = pnand %p309, %p310
      %p312 = pneg %p311
      // Predicated region
      $region33: #{tpu_custom_call.1} parent=5 // pred_check
        _
      $region34: #{tpu_custom_call.1} parent=5 // pred_check_branch
        %314 = sbr.rel (%p311) target = $region36
      $region35: #{tpu_custom_call.1} parent=5 // pred_region
        %s315 = ssub.s32 %s24, 1
        %s316 = sand.u32 %s51, 1
        %s317 = scalar_lea.sflag [#allocation3], %s316
        %s318 = sand.u32 %s51, 1
        %s319 = smul.addr %s318, 32
        %s320 = scalar_lea.vmem [#allocation2], %s319
        // Predicated region
        $region37: #{tpu_custom_call.1} parent=35 // pred_check
          %p321 = pneg %p64
        $region38: #{tpu_custom_call.1} parent=35 // pred_check_branch
          %323 = sbr.rel (%p321) target = $region40
        $region39: #{tpu_custom_call.1} parent=35 // pred_region
          %324 = dma.done %s317, 512
        $region40: #{tpu_custom_call.1} parent=35 // pred_fallthru
          _
        // Predicated region
        $region41: #{tpu_custom_call.1} parent=35 // pred_check
          %p325 = pneg %p90
        $region42: #{tpu_custom_call.1} parent=35 // pred_check_branch
          %327 = sbr.rel (%p325) target = $region44
        $region43: #{tpu_custom_call.1} parent=35 // pred_region
          %328 = dma.done [#allocation6], 256
        $region44: #{tpu_custom_call.1} parent=35 // pred_fallthru
          _
        // Predicated region
        $region45: #{tpu_custom_call.1} parent=35 // pred_check
          %p329 = pneg %p116
        $region46: #{tpu_custom_call.1} parent=35 // pred_check_branch
          %331 = sbr.rel (%p329) target = $region48
        $region47: #{tpu_custom_call.1} parent=35 // pred_region
          %332 = dma.done [#allocation6], 256
        $region48: #{tpu_custom_call.1} parent=35 // pred_fallthru
          _
        // Predicated region
        $region49: #{tpu_custom_call.1} parent=35 // pred_check
          %p333 = pneg %p137
        $region50: #{tpu_custom_call.1} parent=35 // pred_check_branch
          %335 = sbr.rel (%p333) target = $region52
        $region51: #{tpu_custom_call.1} parent=35 // pred_region
          %336 = dma.done [#allocation9], 12288
        $region52: #{tpu_custom_call.1} parent=35 // pred_fallthru
          _
        %s337 = sand.u32 %s51, 1
        %s338 = scalar_lea.sflag [#allocation3], %s337
        %s339 = sand.u32 %s51, 1
        %s340 = smul.addr %s339, 32
        %s341 = scalar_lea.vmem [#allocation2], %s340
        %p342 = pneg %p64
        %p343 = pneg %p61
        %p344 = pneg %p90
        %p345 = pneg %p87
        %p346 = pneg %p116
        %p347 = pneg %p113
        %p348 = pneg %p137
        %p349 = pneg %p134
        %p350 = pneg %p165
        %p351 = pneg %p162
        %s352 = sand.u32 %s152, 1
        %s353 = scalar_lea.sflag [#allocation4], %s352
        %s354 = sand.u32 %s152, 1
        %s355 = smul.addr %s354, 16
        %s356 = scalar_lea.vmem [#allocation10], %s355
        %p357 = pneg %p193
        %p358 = pneg %p190
        %s359 = sand.u32 %s29, 1
        %s360 = scalar_lea.sflag [#allocation12], %s359
        %s361 = sand.u32 %s180, 1
        %s362 = smul.addr %s361, 16
        %s363 = scalar_lea.vmem [#allocation11], %s362
        %p364 = pneg %p221
        %p365 = pneg %p218
        %s366 = sand.u32 %s29, 1
        %s367 = scalar_lea.sflag [#allocation12], %s366
        %s368 = sand.u32 %s208, 1
        %s369 = smul.addr %s368, 16
        %s370 = scalar_lea.vmem [#allocation13], %s369
        %s371 = smul.u32 2, %s34
        %s372 = smul.u32 2, %s34
        %s373 = smul.u32 2, %s34
        %s374 = smul.u32 2, %s34
        %s375 = smul.u32 2, %s34
        %s376 = smul.u32 2, %s34
        %v377 = vld [vmem:[%s320] sm:$0xff]
        %v378 = vld [vmem:[%s320 + $0x8] sm:$0xff]
        %v379 = vld [vmem:[%s320 + $0x10] sm:$0xff]
        %v380 = vld [vmem:[%s320 + $0x18] sm:$0xff]
        %v381 = vmul.f32 %v377, %v377
        %v382 = vmul.f32 %v378, %v378
        %v383 = vmul.f32 %v379, %v379
        %v384 = vmul.f32 %v380, %v380
        %v385 = vadd.f32 %v381, %v382
        %386 = vadd.xlane.f32.xlu0 %v385
        %v387 = vpop.xlane.xlu0 %386
        %v388 = vadd.f32 %v383, %v384
        %389 = vadd.xlane.f32.xlu0 %v388
        %v390 = vpop.xlane.xlu0 %389
        %v391 = vrcp.pop 256.0
        %v392 = vmul.f32 %v387, %v391
        %v393 = vmul.f32 %v390, %v391
        %v394 = vadd.f32 %v392, 1e-06
        %v395 = vadd.f32 %v393, 1e-06
        %v396 = vrsqrt.pop %v394
        %v397 = vrsqrt.pop %v395
        %v398 = vmul.f32 %v377, %v396
        %v399 = vmul.f32 %v378, %v396
        %v400 = vmul.f32 %v379, %v397
        %v401 = vmul.f32 %v380, %v397
        %v402 = vpack.c.bf16 %v400, %v398
        %v403 = vpack.c.bf16 %v401, %v399
        %v404 = vld [vmem:[#allocation8] sm:$0xff]
        %v405 = vld [vmem:[#allocation8 + $0x8] sm:$0xff]
        %v406 = vld [vmem:[#allocation8 + $0x10] sm:$0xff]
        %v407 = vld [vmem:[#allocation8 + $0x18] sm:$0xff]
        %v408 = vld [vmem:[#allocation8 + $0x20] sm:$0xff]
        %v409 = vld [vmem:[#allocation8 + $0x28] sm:$0xff]
        %v410 = vld [vmem:[#allocation8 + $0x30] sm:$0xff]
        %v411 = vld [vmem:[#allocation8 + $0x38] sm:$0xff]
        %v412 = vld [vmem:[#allocation8 + $0x40] sm:$0xff]
        %v413 = vld [vmem:[#allocation8 + $0x48] sm:$0xff]
        %v414 = vld [vmem:[#allocation8 + $0x50] sm:$0xff]
        %v415 = vld [vmem:[#allocation8 + $0x58] sm:$0xff]
        %v416 = vld [vmem:[#allocation8 + $0x60] sm:$0xff]
        %v417 = vld [vmem:[#allocation8 + $0x68] sm:$0xff]
        %v418 = vld [vmem:[#allocation8 + $0x70] sm:$0xff]
        %v419 = vld [vmem:[#allocation8 + $0x78] sm:$0xff]
        %v420 = vld [vmem:[#allocation8 + $0x80] sm:$0xff]
        %v421 = vld [vmem:[#allocation8 + $0x88] sm:$0xff]
        %v422 = vld [vmem:[#allocation8 + $0x90] sm:$0xff]
        %v423 = vld [vmem:[#allocation8 + $0x98] sm:$0xff]
        %v424 = vld [vmem:[#allocation8 + $0xa0] sm:$0xff]
        %v425 = vld [vmem:[#allocation8 + $0xa8] sm:$0xff]
        %v426 = vld [vmem:[#allocation8 + $0xb0] sm:$0xff]
        %v427 = vld [vmem:[#allocation8 + $0xb8] sm:$0xff]
        %v428 = vld [vmem:[#allocation8 + $0xc0] sm:$0xff]
        %v429 = vld [vmem:[#allocation8 + $0xc8] sm:$0xff]
        %v430 = vld [vmem:[#allocation8 + $0xd0] sm:$0xff]
        %v431 = vld [vmem:[#allocation8 + $0xd8] sm:$0xff]
        %v432 = vld [vmem:[#allocation8 + $0xe0] sm:$0xff]
        %v433 = vld [vmem:[#allocation8 + $0xe8] sm:$0xff]
        %v434 = vld [vmem:[#allocation8 + $0xf0] sm:$0xff]
        %v435 = vld [vmem:[#allocation8 + $0xf8] sm:$0xff]
        %v436 = vld [vmem:[#allocation8 + $0x100] sm:$0xff]
        %v437 = vld [vmem:[#allocation8 + $0x108] sm:$0xff]
        %v438 = vld [vmem:[#allocation8 + $0x110] sm:$0xff]
        %v439 = vld [vmem:[#allocation8 + $0x118] sm:$0xff]
        %v440 = vld [vmem:[#allocation8 + $0x120] sm:$0xff]
        %v441 = vld [vmem:[#allocation8 + $0x128] sm:$0xff]
        %v442 = vld [vmem:[#allocation8 + $0x130] sm:$0xff]
        %v443 = vld [vmem:[#allocation8 + $0x138] sm:$0xff]
        %v444 = vld [vmem:[#allocation8 + $0x140] sm:$0xff]
        %v445 = vld [vmem:[#allocation8 + $0x148] sm:$0xff]
        %v446 = vld [vmem:[#allocation8 + $0x150] sm:$0xff]
        %v447 = vld [vmem:[#allocation8 + $0x158] sm:$0xff]
        %v448 = vld [vmem:[#allocation8 + $0x160] sm:$0xff]
        %v449 = vld [vmem:[#allocation8 + $0x168] sm:$0xff]
        %v450 = vld [vmem:[#allocation8 + $0x170] sm:$0xff]
        %v451 = vld [vmem:[#allocation8 + $0x178] sm:$0xff]
        %v452 = vld [vmem:[#allocation8 + $0x180] sm:$0xff]
        %v453 = vld [vmem:[#allocation8 + $0x188] sm:$0xff]
        %v454 = vld [vmem:[#allocation8 + $0x190] sm:$0xff]
        %v455 = vld [vmem:[#allocation8 + $0x198] sm:$0xff]
        %v456 = vld [vmem:[#allocation8 + $0x1a0] sm:$0xff]
        %v457 = vld [vmem:[#allocation8 + $0x1a8] sm:$0xff]
        %v458 = vld [vmem:[#allocation8 + $0x1b0] sm:$0xff]
        %v459 = vld [vmem:[#allocation8 + $0x1b8] sm:$0xff]
        %v460 = vld [vmem:[#allocation8 + $0x1c0] sm:$0xff]
        %v461 = vld [vmem:[#allocation8 + $0x1c8] sm:$0xff]
        %v462 = vld [vmem:[#allocation8 + $0x1d0] sm:$0xff]
        %v463 = vld [vmem:[#allocation8 + $0x1d8] sm:$0xff]
        %v464 = vld [vmem:[#allocation8 + $0x1e0] sm:$0xff]
        %v465 = vld [vmem:[#allocation8 + $0x1e8] sm:$0xff]
        %v466 = vld [vmem:[#allocation8 + $0x1f0] sm:$0xff]
        %v467 = vld [vmem:[#allocation8 + $0x1f8] sm:$0xff]
        %v468 = vld [vmem:[#allocation8 + $0x200] sm:$0xff]
        %v469 = vld [vmem:[#allocation8 + $0x208] sm:$0xff]
        %v470 = vld [vmem:[#allocation8 + $0x210] sm:$0xff]
        %v471 = vld [vmem:[#allocation8 + $0x218] sm:$0xff]
        %v472 = vld [vmem:[#allocation8 + $0x220] sm:$0xff]
        %v473 = vld [vmem:[#allocation8 + $0x228] sm:$0xff]
        %v474 = vld [vmem:[#allocation8 + $0x230] sm:$0xff]
        %v475 = vld [vmem:[#allocation8 + $0x238] sm:$0xff]
        %v476 = vld [vmem:[#allocation8 + $0x240] sm:$0xff]
        %v477 = vld [vmem:[#allocation8 + $0x248] sm:$0xff]
        %v478 = vld [vmem:[#allocation8 + $0x250] sm:$0xff]
        %v479 = vld [vmem:[#allocation8 + $0x258] sm:$0xff]
        %v480 = vld [vmem:[#allocation8 + $0x260] sm:$0xff]
        %v481 = vld [vmem:[#allocation8 + $0x268] sm:$0xff]
        %v482 = vld [vmem:[#allocation8 + $0x270] sm:$0xff]
        %v483 = vld [vmem:[#allocation8 + $0x278] sm:$0xff]
        %v484 = vld [vmem:[#allocation8 + $0x280] sm:$0xff]
        %v485 = vld [vmem:[#allocation8 + $0x288] sm:$0xff]
        %v486 = vld [vmem:[#allocation8 + $0x290] sm:$0xff]
        %v487 = vld [vmem:[#allocation8 + $0x298] sm:$0xff]
        %v488 = vld [vmem:[#allocation8 + $0x2a0] sm:$0xff]
        %v489 = vld [vmem:[#allocation8 + $0x2a8] sm:$0xff]
        %v490 = vld [vmem:[#allocation8 + $0x2b0] sm:$0xff]
        %v491 = vld [vmem:[#allocation8 + $0x2b8] sm:$0xff]
        %v492 = vld [vmem:[#allocation8 + $0x2c0] sm:$0xff]
        %v493 = vld [vmem:[#allocation8 + $0x2c8] sm:$0xff]
        %v494 = vld [vmem:[#allocation8 + $0x2d0] sm:$0xff]
        %v495 = vld [vmem:[#allocation8 + $0x2d8] sm:$0xff]
        %v496 = vld [vmem:[#allocation8 + $0x2e0] sm:$0xff]
        %v497 = vld [vmem:[#allocation8 + $0x2e8] sm:$0xff]
        %v498 = vld [vmem:[#allocation8 + $0x2f0] sm:$0xff]
        %v499 = vld [vmem:[#allocation8 + $0x2f8] sm:$0xff]
        %v596 = vunpack.c.l.b16 %v404
        %v597 = vunpack.c.h.b16 %v404
        %v598 = vunpack.c.l.b16 %v405
        %v599 = vunpack.c.h.b16 %v405
        %v600 = vunpack.c.l.b16 %v406
        %v601 = vunpack.c.h.b16 %v406
        %v602 = vunpack.c.l.b16 %v407
        %v603 = vunpack.c.h.b16 %v407
        %v604 = vunpack.c.l.b16 %v408
        %v605 = vunpack.c.h.b16 %v408
        %v606 = vunpack.c.l.b16 %v409
        %v607 = vunpack.c.h.b16 %v409
        %v608 = vunpack.c.l.b16 %v410
        %v609 = vunpack.c.h.b16 %v410
        %v610 = vunpack.c.l.b16 %v411
        %v611 = vunpack.c.h.b16 %v411
        %v612 = vunpack.c.l.b16 %v412
        %v613 = vunpack.c.h.b16 %v412
        %v614 = vunpack.c.l.b16 %v413
        %v615 = vunpack.c.h.b16 %v413
        %v616 = vunpack.c.l.b16 %v414
        %v617 = vunpack.c.h.b16 %v414
        %v618 = vunpack.c.l.b16 %v415
        %v619 = vunpack.c.h.b16 %v415
        %v620 = vunpack.c.l.b16 %v416
        %v621 = vunpack.c.h.b16 %v416
        %v622 = vunpack.c.l.b16 %v417
        %v623 = vunpack.c.h.b16 %v417
        %v624 = vunpack.c.l.b16 %v418
        %v625 = vunpack.c.h.b16 %v418
        %v626 = vunpack.c.l.b16 %v419
        %v627 = vunpack.c.h.b16 %v419
        %v628 = vunpack.c.l.b16 %v420
        %v629 = vunpack.c.h.b16 %v420
        %v630 = vunpack.c.l.b16 %v421
        %v631 = vunpack.c.h.b16 %v421
        %v632 = vunpack.c.l.b16 %v422
        %v633 = vunpack.c.h.b16 %v422
        %v634 = vunpack.c.l.b16 %v423
        %v635 = vunpack.c.h.b16 %v423
        %v636 = vunpack.c.l.b16 %v424
        %v637 = vunpack.c.h.b16 %v424
        %v638 = vunpack.c.l.b16 %v425
        %v639 = vunpack.c.h.b16 %v425
        %v640 = vunpack.c.l.b16 %v426
        %v641 = vunpack.c.h.b16 %v426
        %v642 = vunpack.c.l.b16 %v427
        %v643 = vunpack.c.h.b16 %v427
        %v644 = vunpack.c.l.b16 %v428
        %v645 = vunpack.c.h.b16 %v428
        %v646 = vunpack.c.l.b16 %v429
        %v647 = vunpack.c.h.b16 %v429
        %v648 = vunpack.c.l.b16 %v430
        %v649 = vunpack.c.h.b16 %v430
        %v650 = vunpack.c.l.b16 %v431
        %v651 = vunpack.c.h.b16 %v431
        %v652 = vunpack.c.l.b16 %v432
        %v653 = vunpack.c.h.b16 %v432
        %v654 = vunpack.c.l.b16 %v433
        %v655 = vunpack.c.h.b16 %v433
        %v656 = vunpack.c.l.b16 %v434
        %v657 = vunpack.c.h.b16 %v434
        %v658 = vunpack.c.l.b16 %v435
        %v659 = vunpack.c.h.b16 %v435
        %v660 = vunpack.c.l.b16 %v436
        %v661 = vunpack.c.h.b16 %v436
        %v662 = vunpack.c.l.b16 %v437
        %v663 = vunpack.c.h.b16 %v437
        %v664 = vunpack.c.l.b16 %v438
        %v665 = vunpack.c.h.b16 %v438
        %v666 = vunpack.c.l.b16 %v439
        %v667 = vunpack.c.h.b16 %v439
        %v668 = vunpack.c.l.b16 %v440
        %v669 = vunpack.c.h.b16 %v440
        %v670 = vunpack.c.l.b16 %v441
        %v671 = vunpack.c.h.b16 %v441
        %v672 = vunpack.c.l.b16 %v442
        %v673 = vunpack.c.h.b16 %v442
        %v674 = vunpack.c.l.b16 %v443
        %v675 = vunpack.c.h.b16 %v443
        %v676 = vunpack.c.l.b16 %v444
        %v677 = vunpack.c.h.b16 %v444
        %v678 = vunpack.c.l.b16 %v445
        %v679 = vunpack.c.h.b16 %v445
        %v680 = vunpack.c.l.b16 %v446
        %v681 = vunpack.c.h.b16 %v446
        %v682 = vunpack.c.l.b16 %v447
        %v683 = vunpack.c.h.b16 %v447
        %v684 = vunpack.c.l.b16 %v448
        %v685 = vunpack.c.h.b16 %v448
        %v686 = vunpack.c.l.b16 %v449
        %v687 = vunpack.c.h.b16 %v449
        %v688 = vunpack.c.l.b16 %v450
        %v689 = vunpack.c.h.b16 %v450
        %v690 = vunpack.c.l.b16 %v451
        %v691 = vunpack.c.h.b16 %v451
        %v692 = vunpack.c.l.b16 %v452
        %v693 = vunpack.c.h.b16 %v452
        %v694 = vunpack.c.l.b16 %v453
        %v695 = vunpack.c.h.b16 %v453
        %v696 = vunpack.c.l.b16 %v454
        %v697 = vunpack.c.h.b16 %v454
        %v698 = vunpack.c.l.b16 %v455
        %v699 = vunpack.c.h.b16 %v455
        %v700 = vunpack.c.l.b16 %v456
        %v701 = vunpack.c.h.b16 %v456
        %v702 = vunpack.c.l.b16 %v457
        %v703 = vunpack.c.h.b16 %v457
        %v704 = vunpack.c.l.b16 %v458
        %v705 = vunpack.c.h.b16 %v458
        %v706 = vunpack.c.l.b16 %v459
        %v707 = vunpack.c.h.b16 %v459
        %v708 = vunpack.c.l.b16 %v460
        %v709 = vunpack.c.h.b16 %v460
        %v710 = vunpack.c.l.b16 %v461
        %v711 = vunpack.c.h.b16 %v461
        %v712 = vunpack.c.l.b16 %v462
        %v713 = vunpack.c.h.b16 %v462
        %v714 = vunpack.c.l.b16 %v463
        %v715 = vunpack.c.h.b16 %v463
        %v716 = vunpack.c.l.b16 %v464
        %v717 = vunpack.c.h.b16 %v464
        %v718 = vunpack.c.l.b16 %v465
        %v719 = vunpack.c.h.b16 %v465
        %v720 = vunpack.c.l.b16 %v466
        %v721 = vunpack.c.h.b16 %v466
        %v722 = vunpack.c.l.b16 %v467
        %v723 = vunpack.c.h.b16 %v467
        %v724 = vunpack.c.l.b16 %v468
        %v725 = vunpack.c.h.b16 %v468
        %v726 = vunpack.c.l.b16 %v469
        %v727 = vunpack.c.h.b16 %v469
        %v728 = vunpack.c.l.b16 %v470
        %v729 = vunpack.c.h.b16 %v470
        %v730 = vunpack.c.l.b16 %v471
        %v731 = vunpack.c.h.b16 %v471
        %v732 = vunpack.c.l.b16 %v472
        %v733 = vunpack.c.h.b16 %v472
        %v734 = vunpack.c.l.b16 %v473
        %v735 = vunpack.c.h.b16 %v473
        %v736 = vunpack.c.l.b16 %v474
        %v737 = vunpack.c.h.b16 %v474
        %v738 = vunpack.c.l.b16 %v475
        %v739 = vunpack.c.h.b16 %v475
        %v740 = vunpack.c.l.b16 %v476
        %v741 = vunpack.c.h.b16 %v476
        %v742 = vunpack.c.l.b16 %v477
        %v743 = vunpack.c.h.b16 %v477
        %v744 = vunpack.c.l.b16 %v478
        %v745 = vunpack.c.h.b16 %v478
        %v746 = vunpack.c.l.b16 %v479
        %v747 = vunpack.c.h.b16 %v479
        %v748 = vunpack.c.l.b16 %v480
        %v749 = vunpack.c.h.b16 %v480
        %v750 = vunpack.c.l.b16 %v481
        %v751 = vunpack.c.h.b16 %v481
        %v752 = vunpack.c.l.b16 %v482
        %v753 = vunpack.c.h.b16 %v482
        %v754 = vunpack.c.l.b16 %v483
        %v755 = vunpack.c.h.b16 %v483
        %v756 = vunpack.c.l.b16 %v484
        %v757 = vunpack.c.h.b16 %v484
        %v758 = vunpack.c.l.b16 %v485
        %v759 = vunpack.c.h.b16 %v485
        %v760 = vunpack.c.l.b16 %v486
        %v761 = vunpack.c.h.b16 %v486
        %v762 = vunpack.c.l.b16 %v487
        %v763 = vunpack.c.h.b16 %v487
        %v764 = vunpack.c.l.b16 %v488
        %v765 = vunpack.c.h.b16 %v488
        %v766 = vunpack.c.l.b16 %v489
        %v767 = vunpack.c.h.b16 %v489
        %v768 = vunpack.c.l.b16 %v490
        %v769 = vunpack.c.h.b16 %v490
        %v770 = vunpack.c.l.b16 %v491
        %v771 = vunpack.c.h.b16 %v491
        %v772 = vunpack.c.l.b16 %v492
        %v773 = vunpack.c.h.b16 %v492
        %v774 = vunpack.c.l.b16 %v493
        %v775 = vunpack.c.h.b16 %v493
        %v776 = vunpack.c.l.b16 %v494
        %v777 = vunpack.c.h.b16 %v494
        %v778 = vunpack.c.l.b16 %v495
        %v779 = vunpack.c.h.b16 %v495
        %v780 = vunpack.c.l.b16 %v496
        %v781 = vunpack.c.h.b16 %v496
        %v782 = vunpack.c.l.b16 %v497
        %v783 = vunpack.c.h.b16 %v497
        %v784 = vunpack.c.l.b16 %v498
        %v785 = vunpack.c.h.b16 %v498
        %v786 = vunpack.c.l.b16 %v499
        %v787 = vunpack.c.h.b16 %v499
        %v788 = vpack.c.b16 %v602, %v596
        %v789 = vpack.c.b16 %v603, %v597
        %v790 = vpack.c.b16 %v604, %v598
        %v791 = vpack.c.b16 %v605, %v599
        %v792 = vpack.c.b16 %v606, %v600
        %v793 = vpack.c.b16 %v607, %v601
        %v794 = vpack.c.b16 %v614, %v608
        %v795 = vpack.c.b16 %v615, %v609
        %v796 = vpack.c.b16 %v616, %v610
        %v797 = vpack.c.b16 %v617, %v611
        %v798 = vpack.c.b16 %v618, %v612
        %v799 = vpack.c.b16 %v619, %v613
        %v800 = vpack.c.b16 %v626, %v620
        %v801 = vpack.c.b16 %v627, %v621
        %v802 = vpack.c.b16 %v628, %v622
        %v803 = vpack.c.b16 %v629, %v623
        %v804 = vpack.c.b16 %v630, %v624
        %v805 = vpack.c.b16 %v631, %v625
        %v806 = vpack.c.b16 %v638, %v632
        %v807 = vpack.c.b16 %v639, %v633
        %v808 = vpack.c.b16 %v640, %v634
        %v809 = vpack.c.b16 %v641, %v635
        %v810 = vpack.c.b16 %v642, %v636
        %v811 = vpack.c.b16 %v643, %v637
        %v812 = vpack.c.b16 %v650, %v644
        %v813 = vpack.c.b16 %v651, %v645
        %v814 = vpack.c.b16 %v652, %v646
        %v815 = vpack.c.b16 %v653, %v647
        %v816 = vpack.c.b16 %v654, %v648
        %v817 = vpack.c.b16 %v655, %v649
        %v818 = vpack.c.b16 %v662, %v656
        %v819 = vpack.c.b16 %v663, %v657
        %v820 = vpack.c.b16 %v664, %v658
        %v821 = vpack.c.b16 %v665, %v659
        %v822 = vpack.c.b16 %v666, %v660
        %v823 = vpack.c.b16 %v667, %v661
        %v824 = vpack.c.b16 %v674, %v668
        %v825 = vpack.c.b16 %v675, %v669
        %v826 = vpack.c.b16 %v676, %v670
        %v827 = vpack.c.b16 %v677, %v671
        %v828 = vpack.c.b16 %v678, %v672
        %v829 = vpack.c.b16 %v679, %v673
        %v830 = vpack.c.b16 %v686, %v680
        %v831 = vpack.c.b16 %v687, %v681
        %v832 = vpack.c.b16 %v688, %v682
        %v833 = vpack.c.b16 %v689, %v683
        %v834 = vpack.c.b16 %v690, %v684
        %v835 = vpack.c.b16 %v691, %v685
        %v836 = vpack.c.b16 %v698, %v692
        %v837 = vpack.c.b16 %v699, %v693
        %v838 = vpack.c.b16 %v700, %v694
        %v839 = vpack.c.b16 %v701, %v695
        %v840 = vpack.c.b16 %v702, %v696
        %v841 = vpack.c.b16 %v703, %v697
        %v842 = vpack.c.b16 %v710, %v704
        %v843 = vpack.c.b16 %v711, %v705
        %v844 = vpack.c.b16 %v712, %v706
        %v845 = vpack.c.b16 %v713, %v707
        %v846 = vpack.c.b16 %v714, %v708
        %v847 = vpack.c.b16 %v715, %v709
        %v848 = vpack.c.b16 %v722, %v716
        %v849 = vpack.c.b16 %v723, %v717
        %v850 = vpack.c.b16 %v724, %v718
        %v851 = vpack.c.b16 %v725, %v719
        %v852 = vpack.c.b16 %v726, %v720
        %v853 = vpack.c.b16 %v727, %v721
        %v854 = vpack.c.b16 %v734, %v728
        %v855 = vpack.c.b16 %v735, %v729
        %v856 = vpack.c.b16 %v736, %v730
        %v857 = vpack.c.b16 %v737, %v731
        %v858 = vpack.c.b16 %v738, %v732
        %v859 = vpack.c.b16 %v739, %v733
        %v860 = vpack.c.b16 %v746, %v740
        %v861 = vpack.c.b16 %v747, %v741
        %v862 = vpack.c.b16 %v748, %v742
        %v863 = vpack.c.b16 %v749, %v743
        %v864 = vpack.c.b16 %v750, %v744
        %v865 = vpack.c.b16 %v751, %v745
        %v866 = vpack.c.b16 %v758, %v752
        %v867 = vpack.c.b16 %v759, %v753
        %v868 = vpack.c.b16 %v760, %v754
        %v869 = vpack.c.b16 %v761, %v755
        %v870 = vpack.c.b16 %v762, %v756
        %v871 = vpack.c.b16 %v763, %v757
        %v872 = vpack.c.b16 %v770, %v764
        %v873 = vpack.c.b16 %v771, %v765
        %v874 = vpack.c.b16 %v772, %v766
        %v875 = vpack.c.b16 %v773, %v767
        %v876 = vpack.c.b16 %v774, %v768
        %v877 = vpack.c.b16 %v775, %v769
        %v878 = vpack.c.b16 %v782, %v776
        %v879 = vpack.c.b16 %v783, %v777
        %v880 = vpack.c.b16 %v784, %v778
        %v881 = vpack.c.b16 %v785, %v779
        %v882 = vpack.c.b16 %v786, %v780
        %v883 = vpack.c.b16 %v787, %v781
        %980 = vmatprep.subr.bf16.mxu0 %v789
        %981 = vmatpush1.bf16.msra.mxu0 %v788
        %982 = vmatprep.subr.bf16.mxu0 %v795
        %983 = vmatpush1.bf16.msra.mxu0 %v794
        %984 = vmatprep.subr.bf16.mxu0 %v801
        %985 = vmatpush1.bf16.msra.mxu0 %v800
        %986 = vmatprep.subr.bf16.mxu0 %v807
        %987 = vmatpush1.bf16.msra.mxu0 %v806
        %988 = vmatprep.subr.bf16.mxu0 %v813
        %989 = vmatpush1.bf16.msra.mxu0 %v812
        %990 = vmatprep.subr.bf16.mxu0 %v819
        %991 = vmatpush1.bf16.msra.mxu0 %v818
        %992 = vmatprep.subr.bf16.mxu0 %v825
        %993 = vmatpush1.bf16.msra.mxu0 %v824
        %994 = vmatprep.subr.bf16.mxu0 %v831
        %995 = vmatpush1.bf16.msra.mxu0 %v830
        %996 = vmatprep.subr.bf16.mxu0 %v837
        %997 = vmatpush1.bf16.msra.mxu0 %v836
        %998 = vmatprep.subr.bf16.mxu0 %v843
        %999 = vmatpush1.bf16.msra.mxu0 %v842
        %1000 = vmatprep.subr.bf16.mxu0 %v849
        %1001 = vmatpush1.bf16.msra.mxu0 %v848
        %1002 = vmatprep.subr.bf16.mxu0 %v855
        %1003 = vmatpush1.bf16.msra.mxu0 %v854
        %1004 = vmatprep.subr.bf16.mxu0 %v861
        %1005 = vmatpush1.bf16.msra.mxu0 %v860
        %1006 = vmatprep.subr.bf16.mxu0 %v867
        %1007 = vmatpush1.bf16.msra.mxu0 %v866
        %1008 = vmatprep.subr.bf16.mxu0 %v873
        %1009 = vmatpush1.bf16.msra.mxu0 %v872
        %1010 = vmatprep.subr.bf16.mxu0 %v879
        %1011 = vmatpush1.bf16.msra.mxu0 %v878
        %1012 = vmatprep.mubr.bf16.mxu0 %v403
        %1013 = vmatmul.mubr.bf16.gmra.mrb[0].mxu0 %v402
        %v1014 = vpop.f32.mrb[0].mxu0
        %v1015 = vadd.f32 0.0, %v1014
        %v1016 = vpop.f32.mrb[0].mxu0
        %v1017 = vadd.f32 0.0, %v1016
        %v1018 = vpop.f32.mrb[0].mxu0
        %v1019 = vadd.f32 0.0, %v1018
        %v1020 = vpop.f32.mrb[0].mxu0
        %v1021 = vadd.f32 0.0, %v1020
        %1022 = vdwg.mxu0
        %1023 = vmatprep.subr.bf16.mxu0 %v791
        %1024 = vmatpush1.bf16.msra.mxu0 %v790
        %1025 = vmatprep.subr.bf16.mxu0 %v797
        %1026 = vmatpush1.bf16.msra.mxu0 %v796
        %1027 = vmatprep.subr.bf16.mxu0 %v803
        %1028 = vmatpush1.bf16.msra.mxu0 %v802
        %1029 = vmatprep.subr.bf16.mxu0 %v809
        %1030 = vmatpush1.bf16.msra.mxu0 %v808
        %1031 = vmatprep.subr.bf16.mxu0 %v815
        %1032 = vmatpush1.bf16.msra.mxu0 %v814
        %1033 = vmatprep.subr.bf16.mxu0 %v821
        %1034 = vmatpush1.bf16.msra.mxu0 %v820
        %1035 = vmatprep.subr.bf16.mxu0 %v827
        %1036 = vmatpush1.bf16.msra.mxu0 %v826
        %1037 = vmatprep.subr.bf16.mxu0 %v833
        %1038 = vmatpush1.bf16.msra.mxu0 %v832
        %1039 = vmatprep.subr.bf16.mxu0 %v839
        %1040 = vmatpush1.bf16.msra.mxu0 %v838
        %1041 = vmatprep.subr.bf16.mxu0 %v845
        %1042 = vmatpush1.bf16.msra.mxu0 %v844
        %1043 = vmatprep.subr.bf16.mxu0 %v851
        %1044 = vmatpush1.bf16.msra.mxu0 %v850
        %1045 = vmatprep.subr.bf16.mxu0 %v857
        %1046 = vmatpush1.bf16.msra.mxu0 %v856
        %1047 = vmatprep.subr.bf16.mxu0 %v863
        %1048 = vmatpush1.bf16.msra.mxu0 %v862
        %1049 = vmatprep.subr.bf16.mxu0 %v869
        %1050 = vmatpush1.bf16.msra.mxu0 %v868
        %1051 = vmatprep.subr.bf16.mxu0 %v875
        %1052 = vmatpush1.bf16.msra.mxu0 %v874
        %1053 = vmatprep.subr.bf16.mxu0 %v881
        %1054 = vmatpush1.bf16.msra.mxu0 %v880
        %1055 = vmatprep.mubr.bf16.mxu0 %v403
        %1056 = vmatmul.mubr.bf16.gmra.mrb[0].mxu0 %v402
        %v1057 = vpop.f32.mrb[0].mxu0
        %v1058 = vadd.f32 0.0, %v1057
        %v1059 = vpop.f32.mrb[0].mxu0
        %v1060 = vadd.f32 0.0, %v1059
        %v1061 = vpop.f32.mrb[0].mxu0
        %v1062 = vadd.f32 0.0, %v1061
        %v1063 = vpop.f32.mrb[0].mxu0
        %v1064 = vadd.f32 0.0, %v1063
        %1065 = vdwg.mxu0
        %1066 = vmatprep.subr.bf16.mxu0 %v793
        %1067 = vmatpush1.bf16.msra.mxu0 %v792
        %1068 = vmatprep.subr.bf16.mxu0 %v799
        %1069 = vmatpush1.bf16.msra.mxu0 %v798
        %1070 = vmatprep.subr.bf16.mxu0 %v805
        %1071 = vmatpush1.bf16.msra.mxu0 %v804
        %1072 = vmatprep.subr.bf16.mxu0 %v811
        %1073 = vmatpush1.bf16.msra.mxu0 %v810
        %1074 = vmatprep.subr.bf16.mxu0 %v817
        %1075 = vmatpush1.bf16.msra.mxu0 %v816
        %1076 = vmatprep.subr.bf16.mxu0 %v823
        %1077 = vmatpush1.bf16.msra.mxu0 %v822
        %1078 = vmatprep.subr.bf16.mxu0 %v829
        %1079 = vmatpush1.bf16.msra.mxu0 %v828
        %1080 = vmatprep.subr.bf16.mxu0 %v835
        %1081 = vmatpush1.bf16.msra.mxu0 %v834
        %1082 = vmatprep.subr.bf16.mxu0 %v841
        %1083 = vmatpush1.bf16.msra.mxu0 %v840
        %1084 = vmatprep.subr.bf16.mxu0 %v847
        %1085 = vmatpush1.bf16.msra.mxu0 %v846
        %1086 = vmatprep.subr.bf16.mxu0 %v853
        %1087 = vmatpush1.bf16.msra.mxu0 %v852
        %1088 = vmatprep.subr.bf16.mxu0 %v859
        %1089 = vmatpush1.bf16.msra.mxu0 %v858
        %1090 = vmatprep.subr.bf16.mxu0 %v865
        %1091 = vmatpush1.bf16.msra.mxu0 %v864
        %1092 = vmatprep.subr.bf16.mxu0 %v871
        %1093 = vmatpush1.bf16.msra.mxu0 %v870
        %1094 = vmatprep.subr.bf16.mxu0 %v877
        %1095 = vmatpush1.bf16.msra.mxu0 %v876
        %1096 = vmatprep.subr.bf16.mxu0 %v883
        %1097 = vmatpush1.bf16.msra.mxu0 %v882
        %1098 = vmatprep.mubr.bf16.mxu0 %v403
        %1099 = vmatmul.mubr.bf16.gmra.mrb[0].mxu0 %v402
        %v1100 = vpop.f32.mrb[0].mxu0
        %v1101 = vadd.f32 0.0, %v1100
        %v1102 = vpop.f32.mrb[0].mxu0
        %v1103 = vadd.f32 0.0, %v1102
        %v1104 = vpop.f32.mrb[0].mxu0
        %v1105 = vadd.f32 0.0, %v1104
        %v1106 = vpop.f32.mrb[0].mxu0
        %v1107 = vadd.f32 0.0, %v1106
        %1108 = vdwg.mxu0
        %v1109 = vld [vmem:[#allocation5] sm:$0xff]
        %v1110 = vld [vmem:[#allocation5 + $0x8] sm:$0xff]
        %v1111 = vld [vmem:[#allocation7] sm:$0xff]
        %v1112 = vld [vmem:[#allocation7 + $0x8] sm:$0xff]
        %v1113 = vmul.f32 %v1015, %v1109
        %v1114 = vmul.f32 %v1019, %v1110
        %1115 = vrot.lane.b32.xlu0 %v1015, 64
        %v1116 = vpop.permute.xlu0 %1115
        %1117 = vrot.lane.b32.xlu0 %v1019, 64
        %v1118 = vpop.permute.xlu0 %1117
        %v1119 = vmul.f32 %v1116, %v1111
        %v1120 = vmul.f32 %v1118, %v1112
        %v1121 = vadd.f32 %v1113, %v1119
        %v1122 = vadd.f32 %v1114, %v1120
        %v1123 = vpack.c.bf16 %v1122, %v1121
        %v1125 = vunpack.c.l.b16 %v1123
        %v1126 = vunpack.c.h.b16 %v1123
        %v1127 = vpack.c.b16 %v1125, %v1125
        %v1128 = vpack.c.b16 %v1126, %v1126
        %1131 = vst [vmem:[%s356] sm:$0xf] %v1127
        %1132 = vst [vmem:[%s356 + $0x8] sm:$0xf] %v1128
        %v1133 = vmul.f32 %v1058, %v1109
        %v1134 = vmul.f32 %v1062, %v1110
        %1135 = vrot.lane.b32.xlu0 %v1058, 64
        %v1136 = vpop.permute.xlu0 %1135
        %1137 = vrot.lane.b32.xlu0 %v1062, 64
        %v1138 = vpop.permute.xlu0 %1137
        %v1139 = vmul.f32 %v1136, %v1111
        %v1140 = vmul.f32 %v1138, %v1112
        %v1141 = vadd.f32 %v1133, %v1139
        %v1142 = vadd.f32 %v1134, %v1140
        %v1143 = vpack.c.bf16 %v1142, %v1141
        %v1145 = vunpack.c.l.b16 %v1143
        %v1146 = vunpack.c.h.b16 %v1143
        %v1147 = vpack.c.b16 %v1145, %v1145
        %v1148 = vpack.c.b16 %v1146, %v1146
        %1151 = vst [vmem:[%s363] sm:$0xf] %v1147
        %1152 = vst [vmem:[%s363 + $0x8] sm:$0xf] %v1148
        %v1153 = vpack.c.bf16 %v1105, %v1101
        %v1155 = vunpack.c.l.b16 %v1153
        %v1156 = vunpack.c.h.b16 %v1153
        %v1157 = vpack.c.b16 %v1155, %v1155
        %v1158 = vpack.c.b16 %v1156, %v1156
        %1161 = vst [vmem:[%s370] sm:$0xf] %v1157
        %1162 = vst [vmem:[%s370 + $0x8] sm:$0xf] %v1158
        %v1163 = vmul.f32 %v1017, %v1109
        %v1164 = vmul.f32 %v1021, %v1110
        %1165 = vrot.lane.b32.xlu0 %v1017, 64
        %v1166 = vpop.permute.xlu0 %1165
        %1167 = vrot.lane.b32.xlu0 %v1021, 64
        %v1168 = vpop.permute.xlu0 %1167
        %v1169 = vmul.f32 %v1166, %v1111
        %v1170 = vmul.f32 %v1168, %v1112
        %v1171 = vadd.f32 %v1163, %v1169
        %v1172 = vadd.f32 %v1164, %v1170
        %v1173 = vpack.c.bf16 %v1172, %v1171
        %v1175 = vunpack.c.l.b16 %v1173
        %v1176 = vunpack.c.h.b16 %v1173
        %v1177 = vpack.c.b16 %v1175, %v1175
        %v1178 = vpack.c.b16 %v1176, %v1176
        %1181 = vst [vmem:[%s356 + $0x4] sm:$0xf] %v1177
        %1182 = vst [vmem:[%s356 + $0xc] sm:$0xf] %v1178
        %v1183 = vmul.f32 %v1060, %v1109
        %v1184 = vmul.f32 %v1064, %v1110
        %1185 = vrot.lane.b32.xlu0 %v1060, 64
        %v1186 = vpop.permute.xlu0 %1185
        %1187 = vrot.lane.b32.xlu0 %v1064, 64
        %v1188 = vpop.permute.xlu0 %1187
        %v1189 = vmul.f32 %v1186, %v1111
        %v1190 = vmul.f32 %v1188, %v1112
        %v1191 = vadd.f32 %v1183, %v1189
        %v1192 = vadd.f32 %v1184, %v1190
        %v1193 = vpack.c.bf16 %v1192, %v1191
        %v1195 = vunpack.c.l.b16 %v1193
        %v1196 = vunpack.c.h.b16 %v1193
        %v1197 = vpack.c.b16 %v1195, %v1195
        %v1198 = vpack.c.b16 %v1196, %v1196
        %1201 = vst [vmem:[%s363 + $0x4] sm:$0xf] %v1197
        %1202 = vst [vmem:[%s363 + $0xc] sm:$0xf] %v1198
        %v1203 = vpack.c.bf16 %v1107, %v1103
        %v1205 = vunpack.c.l.b16 %v1203
        %v1206 = vunpack.c.h.b16 %v1203
        %v1207 = vpack.c.b16 %v1205, %v1205
        %v1208 = vpack.c.b16 %v1206, %v1206
        %1211 = vst [vmem:[%s370 + $0x4] sm:$0xf] %v1207
        %1212 = vst [vmem:[%s370 + $0xc] sm:$0xf] %v1208
        %s1213 = sand.u32 %s152, 1
        %s1214 = scalar_lea.sflag [#allocation4], %s1213
        %s1215 = sand.u32 %s152, 1
        %s1216 = smul.addr %s1215, 16
        %s1217 = scalar_lea.vmem [#allocation10], %s1216
        %s1218 = sand.u32 %s29, 1
        %s1219 = scalar_lea.sflag [#allocation12], %s1218
        %s1220 = sand.u32 %s180, 1
        %s1221 = smul.addr %s1220, 16
        %s1222 = scalar_lea.vmem [#allocation11], %s1221
        %s1223 = sand.u32 %s29, 1
        %s1224 = scalar_lea.sflag [#allocation12], %s1223
        %s1225 = sand.u32 %s208, 1
        %s1226 = smul.addr %s1225, 16
        %s1227 = scalar_lea.vmem [#allocation13], %s1226
        // Predicated region
        $region53: #{tpu_custom_call.1} parent=35 // pred_check
          %p1228 = pneg %p162
        $region54: #{tpu_custom_call.1} parent=35 // pred_check_branch
          %1230 = sbr.rel (%p1228) target = $region56
        $region55: #{tpu_custom_call.1} parent=35 // pred_region
          %s1231 = smul.u32 2, %s34
          %s1233 = ssub.s32 256, 256
          %1234 = vsyncadd %s1214, %s1233
          %s1235 = smul.addr %s1231, 2
          %s1236 = smul.addr %s33, 4
          %s1237 = sadd.s32 %s1235, %s1236
          %s1238 = smul.addr %s1237, 64
          %s1239 = scalar_lea.hbm %s4, %s1238
          %s1240 = sshll.u32 %s1217, 4
          %s1241 = int_to_ptr.vmem [resolvable:$true] %s1240
          %1246 = dma.vmem_to_hbm [thread:$0]  %s1241, 256, %s1239, %s1214, 128, 128, 8
        $region56: #{tpu_custom_call.1} parent=35 // pred_fallthru
          _
        // Predicated region
        $region57: #{tpu_custom_call.1} parent=35 // pred_check
          %p1247 = pneg %p190
        $region58: #{tpu_custom_call.1} parent=35 // pred_check_branch
          %1249 = sbr.rel (%p1247) target = $region60
        $region59: #{tpu_custom_call.1} parent=35 // pred_region
          %s1250 = smul.u32 2, %s34
          %s1252 = ssub.s32 256, 256
          %1253 = vsyncadd %s1219, %s1252
          %s1254 = smul.addr %s1250, 2
          %s1255 = smul.addr %s33, 4
          %s1256 = sadd.s32 %s1254, %s1255
          %s1257 = smul.addr %s1256, 64
          %s1258 = scalar_lea.hbm %s5, %s1257
          %s1259 = sshll.u32 %s1222, 4
          %s1260 = int_to_ptr.vmem [resolvable:$true] %s1259
          %1265 = dma.vmem_to_hbm [thread:$0]  %s1260, 256, %s1258, %s1219, 128, 128, 8
        $region60: #{tpu_custom_call.1} parent=35 // pred_fallthru
          _
        // Predicated region
        $region61: #{tpu_custom_call.1} parent=35 // pred_check
          %p1266 = pneg %p218
        $region62: #{tpu_custom_call.1} parent=35 // pred_check_branch
          %1268 = sbr.rel (%p1266) target = $region64
        $region63: #{tpu_custom_call.1} parent=35 // pred_region
          %s1269 = smul.u32 2, %s34
          %s1271 = ssub.s32 256, 256
          %1272 = vsyncadd %s1224, %s1271
          %s1273 = smul.addr %s1269, 2
          %s1274 = smul.addr %s33, 4
          %s1275 = sadd.s32 %s1273, %s1274
          %s1276 = smul.addr %s1275, 64
          %s1277 = scalar_lea.hbm %s6, %s1276
          %s1278 = sshll.u32 %s1227, 4
          %s1279 = int_to_ptr.vmem [resolvable:$true] %s1278
          %1284 = dma.vmem_to_hbm [thread:$0]  %s1279, 256, %s1277, %s1224, 128, 128, 8
        $region64: #{tpu_custom_call.1} parent=35 // pred_fallthru
          _
      $region36: #{tpu_custom_call.1} parent=5 // pred_fallthru
        _
      %p1285 = scmp.le.s32.totalorder 2, %s24
      // Predicated region
      $region65: #{tpu_custom_call.1} parent=5 // pred_check
        %p1286 = pneg %p1285
      $region66: #{tpu_custom_call.1} parent=5 // pred_check_branch
        %1288 = sbr.rel (%p1286) target = $region68
      $region67: #{tpu_custom_call.1} parent=5 // pred_region
        %s1289 = ssub.s32 %s24, 2
        // Predicated region
        $region69: #{tpu_custom_call.1} parent=67 // pred_check
          %p1290 = pneg %p168
        $region70: #{tpu_custom_call.1} parent=67 // pred_check_branch
          %1292 = sbr.rel (%p1290) target = $region72
        $region71: #{tpu_custom_call.1} parent=67 // pred_region
          %s1293 = sand.u32 %s153, 1
          %s1294 = scalar_lea.sflag [#allocation4], %s1293
          %s1295 = sand.u32 %s153, 1
          %s1296 = smul.addr %s1295, 16
          %s1297 = scalar_lea.vmem [#allocation10], %s1296
          %1298 = dma.done %s1294, 256
        $region72: #{tpu_custom_call.1} parent=67 // pred_fallthru
          _
        // Predicated region
        $region73: #{tpu_custom_call.1} parent=67 // pred_check
          %p1299 = pneg %p196
        $region74: #{tpu_custom_call.1} parent=67 // pred_check_branch
          %1301 = sbr.rel (%p1299) target = $region76
        $region75: #{tpu_custom_call.1} parent=67 // pred_region
          %s1302 = sand.u32 %s30, 1
          %s1303 = scalar_lea.sflag [#allocation12], %s1302
          %s1304 = sand.u32 %s181, 1
          %s1305 = smul.addr %s1304, 16
          %s1306 = scalar_lea.vmem [#allocation11], %s1305
          %1307 = dma.done %s1303, 256
        $region76: #{tpu_custom_call.1} parent=67 // pred_fallthru
          _
        // Predicated region
        $region77: #{tpu_custom_call.1} parent=67 // pred_check
          %p1308 = pneg %p224
        $region78: #{tpu_custom_call.1} parent=67 // pred_check_branch
          %1310 = sbr.rel (%p1308) target = $region80
        $region79: #{tpu_custom_call.1} parent=67 // pred_region
          %s1311 = sand.u32 %s30, 1
          %s1312 = scalar_lea.sflag [#allocation12], %s1311
          %s1313 = sand.u32 %s209, 1
          %s1314 = smul.addr %s1313, 16
          %s1315 = scalar_lea.vmem [#allocation13], %s1314
          %1316 = dma.done %s1312, 256
        $region80: #{tpu_custom_call.1} parent=67 // pred_fallthru
          _
      $region68: #{tpu_custom_call.1} parent=5 // pred_fallthru
        _
    $region6: #{tpu_custom_call.1} parent=1 // loop_footer
      %s28 = sadd.s32 1, %s24
    $region7: #{tpu_custom_call.1} parent=1 // loop_footer_branch
      %23 = sbr.rel target = $region3
    $region8: #{tpu_custom_call.1} parent=1 // loop_exit
      _
    %1317 = vsyncpa [#allocation3], 1
    %s1318 = scalar_lea.sflag [#allocation3], 1
    %1319 = vsyncpa %s1318, 1
    %1320 = vsyncpa [#allocation6], 1
    %1321 = vsyncpa [#allocation9], 1
    %1322 = vsyncpa [#allocation4], 1
    %s1323 = scalar_lea.sflag [#allocation4], 1
    %1324 = vsyncpa %s1323, 1
    %1325 = vsyncpa [#allocation12], 1
    %s1326 = scalar_lea.sflag [#allocation12], 1
    %1327 = vsyncpa %s1326, 1

</llo_original>
